<compile_context>
chip_gen: v6e
topology: v6e:2x2x1
jax: 0.10.0
libtpu: 0.0.40
codegen_flags: <defaults>
</compile_context>

<pallas_src>
import functools
import math

import jax
import jax.numpy as jnp
from jax import lax
from jax.experimental import pallas as pl
from jax.experimental.pallas import tpu as pltpu


# ----------------------------- in-kernel helpers -----------------------------

def _layernorm(y, gamma, beta, eps):
    mu = jnp.mean(y, axis=-1, keepdims=True)
    yc = y - mu
    var = jnp.mean(yc * yc, axis=-1, keepdims=True)
    return yc * lax.rsqrt(var + eps) * gamma + beta


def _mha_self_output_kernel(x_ref, mask_ref, wqkv_ref, bqkv_ref, wo_ref, bo_ref,
                            wso_ref, bso_ref, g_ref, beta_ref, o_ref, *,
                            num_heads, eps, apply_row_mask):
    """Fused multi-head self-attention + SelfOutput for one batch element.

    For production S on v7x, add a KV grid axis ("arbitrary") with online softmax
    so the (S,S) score tile never has to live whole in VMEM; at the module's
    doc-level shapes whole-sequence attention per step is fine on v5e/v6e.
    """
    f32 = jnp.float32
    x = x_ref[0]                                  # (S, E)
    S, E = x.shape
    d = E // num_heads
    bias = mask_ref[0]                            # (1, S) additive key mask (0 / -1e4)

    # One wide fused QKV projection: (S,E) @ (E,3E).  1/sqrt(d) is already folded
    # into the Q columns of wqkv / bqkv at param-prep time (once, not per call).
    # For production: cast operands to bf16, keep preferred_element_type=f32.
    qkv = jnp.dot(x, wqkv_ref[...], preferred_element_type=f32) + bqkv_ref[...]

    # Per-head attention core.  QK^T / softmax / PV are inherently head-batched,
    # so a small static loop over lane slices; every dot is a plain 2-D MXU matmul.
    ctx_parts = []
    for h in range(num_heads):
        q_h = qkv[:, h * d:(h + 1) * d]
        k_h = qkv[:, E + h * d:E + (h + 1) * d]
        v_h = qkv[:, 2 * E + h * d:2 * E + (h + 1) * d]
        # scores = q @ k^T + key bias (contract over d, no explicit transpose)
        s = lax.dot_general(q_h, k_h, (((1,), (1,)), ((), ())),
                            preferred_element_type=f32) + bias
        m = jnp.max(s, axis=-1, keepdims=True)
        p = jnp.exp(s - m)
        l = jnp.sum(p, axis=-1, keepdims=True)
        # Normalize AFTER the PV matmul: the divide touches (S,d), not (S,S).
        ctx_parts.append(jnp.dot(p, v_h, preferred_element_type=f32) / l)

    # Head-combine fused into the MXU: concat to (S, H*d) = (S, E) and do ONE
    # (S,E)@(E,E) out-projection.  No (H,S,E) intermediate, no VPU add-tree.
    ctx = jnp.concatenate(ctx_parts, axis=-1)
    attn = jnp.dot(ctx, wo_ref[...], preferred_element_type=f32) + bo_ref[...]

    # Fused SelfOutput: Linear + residual + LayerNorm (dropout = eval identity).
    y = jnp.dot(attn, wso_ref[...], preferred_element_type=f32) + bso_ref[...] + x
    out = _layernorm(y, g_ref[...], beta_ref[...], eps)

    if apply_row_mask:
        # Row (query-position) multiplier, derived from the additive key mask so no
        # lane-width-1 input is needed.  Column-orientation via a diag extract
        # (iota compare + row-reduce) instead of a sub-tile transpose.
        valid = jnp.broadcast_to((bias > -5000.0).astype(f32), (S, S))
        rid = lax.broadcasted_iota(jnp.int32, (S, S), 0)
        cid = lax.broadcasted_iota(jnp.int32, (S, S), 1)
        row_mask = jnp.max(jnp.where(rid == cid, valid, 0.0),
                           axis=-1, keepdims=True)       # (S, 1)
        out = out * row_mask
    o_ref[0] = out.astype(o_ref.dtype)


def _intermediate_final_kernel(w_ref, e_ref, wi_ref, bi_ref, wf_ref, bf_ref,
                               gw_ref, bw_ref, ge_ref, be_ref, ow_ref, oe_ref,
                               *, hd, eps):
    """Fused tail for a tile of B*S rows:
       [word|ent] @ stacked-intermediate-W  -> GELU -> one wide final matmul
       -> slice -> residual + LayerNorm for both branches.  `hidden` never leaves VMEM."""
    f32 = jnp.float32
    wa = w_ref[...]                                       # (tm, Hd)
    ea = e_ref[...]                                       # (tm, Ed)
    xcat = jnp.concatenate([wa, ea], axis=-1)             # (tm, Hd+Ed)

    # Both intermediate Linears in one matmul (biases pre-summed at prep time).
    h = jnp.dot(xcat, wi_ref[...], preferred_element_type=f32) + bi_ref[...]
    # exact-erf GELU (torch F.gelu default)
    h = 0.5 * h * (1.0 + lax.erf(h * (1.0 / math.sqrt(2.0))))

    # Both final SelfOutput Linears in one wide matmul, then slice per branch.
    y = jnp.dot(h, wf_ref[...], preferred_element_type=f32) + bf_ref[...] + xcat
    ow_ref[...] = _layernorm(y[:, :hd], gw_ref[...], bw_ref[...], eps).astype(ow_ref.dtype)
    oe_ref[...] = _layernorm(y[:, hd:], ge_ref[...], be_ref[...], eps).astype(oe_ref.dtype)


# ----------------------------- pallas_call wrappers --------------------------

def _ws(shape):
    """Grid-invariant (weight) BlockSpec: constant index_map, single-buffered.
    The same block is reused every grid step, so double-buffering it only costs
    VMEM (critical on v7x's 64 MiB)."""
    nd = len(shape)
    return pl.BlockSpec(shape, lambda *_: (0,) * nd, pipeline_mode=pl.Buffered(1))


def _compiler_params(vmem_limit_bytes):
    kw = {"dimension_semantics": ("parallel",)}
    if vmem_limit_bytes is not None:
        # Raise this for production dims (default scoped VMEM: 16 MiB v5e / 32 MiB v6e, v7x).
        kw["vmem_limit_bytes"] = vmem_limit_bytes
    return pltpu.CompilerParams(**kw)


def mha_self_output_forward(x, add_mask, p, num_heads, *, apply_row_mask=False,
                            eps=1e-5, vmem_limit_bytes=None):
    """Fused MHA + SelfOutput (+ optional ent row mask) for one branch. grid=(B,)."""
    B, S, E = x.shape
    kern = functools.partial(_mha_self_output_kernel, num_heads=num_heads,
                             eps=eps, apply_row_mask=apply_row_mask)
    return pl.pallas_call(
        kern,
        out_shape=jax.ShapeDtypeStruct((B, S, E), x.dtype),
        grid=(B,),
        in_specs=[
            pl.BlockSpec((1, S, E), lambda b: (b, 0, 0)),
            pl.BlockSpec((1, 1, S), lambda b: (b, 0, 0)),
            _ws((E, 3 * E)), _ws((1, 3 * E)),
            _ws((E, E)), _ws((1, E)),
            _ws((E, E)), _ws((1, E)), _ws((1, E)), _ws((1, E)),
        ],
        out_specs=pl.BlockSpec((1, S, E), lambda b: (b, 0, 0)),
        compiler_params=_compiler_params(vmem_limit_bytes),
    )(x, add_mask, p["wqkv"], p["bqkv"], p["wot"], p["bo"],
      p["wso"], p["bso"], p["gamma"], p["beta"])


def intermediate_final_forward(word_x, ent_x, p, *, eps=1e-5, row_block=256,
                               vmem_limit_bytes=None):
    """Fused tail over the flattened (B*S, feat) activations, tiled by rows."""
    B, S, Hd = word_x.shape
    Ed = ent_x.shape[-1]
    Im = p["w_int"].shape[-1]
    rows = B * S
    w2 = word_x.reshape(rows, Hd)                 # free reshapes (contiguous)
    e2 = ent_x.reshape(rows, Ed)
    tm = rows if rows <= row_block else row_block  # row_block is a multiple of 8
    grid = (pl.cdiv(rows, tm),)
    ow, oe = pl.pallas_call(
        functools.partial(_intermediate_final_kernel, hd=Hd, eps=eps),
        out_shape=(jax.ShapeDtypeStruct((rows, Hd), word_x.dtype),
                   jax.ShapeDtypeStruct((rows, Ed), ent_x.dtype)),
        grid=grid,
        in_specs=[
            pl.BlockSpec((tm, Hd), lambda r: (r, 0)),
            pl.BlockSpec((tm, Ed), lambda r: (r, 0)),
            _ws((Hd + Ed, Im)), _ws((1, Im)),
            _ws((Im, Hd + Ed)), _ws((1, Hd + Ed)),
            _ws((1, Hd)), _ws((1, Hd)), _ws((1, Ed)), _ws((1, Ed)),
        ],
        out_specs=(pl.BlockSpec((tm, Hd), lambda r: (r, 0)),
                   pl.BlockSpec((tm, Ed), lambda r: (r, 0))),
        compiler_params=_compiler_params(vmem_limit_bytes),
    )(w2, e2, p["w_int"], p["b_int"], p["w_fin"], p["b_fin"],
      p["gw"], p["bw"], p["ge"], p["be"])
    return ow.reshape(B, S, Hd), oe.reshape(B, S, Ed)


# ----------------------------- parameters ------------------------------------

def _linear_params(key, din, dout, scale=0.05):
    kw, kb = jax.random.split(key)
    return {"wt": jax.random.normal(kw, (din, dout), jnp.float32) * scale,
            "b": jax.random.normal(kb, (1, dout), jnp.float32) * scale}


def _self_output_params(key, din, dout):
    kw, kg, kb = jax.random.split(key, 3)
    p = _linear_params(kw, din, dout)
    p["gamma"] = 1.0 + 0.1 * jax.random.normal(kg, (1, dout), jnp.float32)
    p["beta"] = 0.1 * jax.random.normal(kb, (1, dout), jnp.float32)
    return p


def _mha_params(key, e, scale=0.05):
    ks = jax.random.split(key, 8)
    return {
        "wqt": jax.random.normal(ks[0], (e, e), jnp.float32) * scale,
        "wkt": jax.random.normal(ks[1], (e, e), jnp.float32) * scale,
        "wvt": jax.random.normal(ks[2], (e, e), jnp.float32) * scale,
        "bq": jax.random.normal(ks[3], (1, e), jnp.float32) * scale,
        "bk": jax.random.normal(ks[4], (1, e), jnp.float32) * scale,
        "bv": jax.random.normal(ks[5], (1, e), jnp.float32) * scale,
        "wot": jax.random.normal(ks[6], (e, e), jnp.float32) * scale,
        "bo": jax.random.normal(ks[7], (1, e), jnp.float32) * scale,
    }


def init_adaption_params(key, hidden_dim, ent_hidden_dim, kg_intermediate_dim):
    ks = jax.random.split(key, 8)
    return {
        "word_att": _mha_params(ks[0], hidden_dim),
        "word_self_output": _self_output_params(ks[1], hidden_dim, hidden_dim),
        "ent_att": _mha_params(ks[2], ent_hidden_dim),
        "ent_self_output": _self_output_params(ks[3], ent_hidden_dim, ent_hidden_dim),
        "intermediate": _linear_params(ks[4], hidden_dim, kg_intermediate_dim),
        "intermediate_ent": _linear_params(ks[5], ent_hidden_dim, kg_intermediate_dim),
        "final_word": _self_output_params(ks[6], kg_intermediate_dim, hidden_dim),
        "final_ent": _self_output_params(ks[7], kg_intermediate_dim, ent_hidden_dim),
    }


def prepare_kernel_params(params, num_heads):
    """One-time fusion of raw module params into kernel-ready form (NOT per call):
    QKV packed with 1/sqrt(d) folded into the Q columns; tail intermediate weights
    stacked (and their biases summed); both final SelfOutput weights concatenated."""
    def fuse_att(att, so, e):
        scale = 1.0 / math.sqrt(e // num_heads)
        return {
            "wqkv": jnp.concatenate([att["wqt"] * scale, att["wkt"], att["wvt"]], axis=1),
            "bqkv": jnp.concatenate([att["bq"] * scale, att["bk"], att["bv"]], axis=1),
            "wot": att["wot"], "bo": att["bo"],
            "wso": so["wt"], "bso": so["b"], "gamma": so["gamma"], "beta": so["beta"],
        }

    hd = params["word_att"]["wqt"].shape[0]
    ed = params["ent_att"]["wqt"].shape[0]
    tail = {
        "w_int": jnp.concatenate([params["intermediate"]["wt"],
                                  params["intermediate_ent"]["wt"]], axis=0),
        "b_int": params["intermediate"]["b"] + params["intermediate_ent"]["b"],
        "w_fin": jnp.concatenate([params["final_word"]["wt"],
                                  params["final_ent"]["wt"]], axis=1),
        "b_fin": jnp.concatenate([params["final_word"]["b"],
                                  params["final_ent"]["b"]], axis=1),
        "gw": params["final_word"]["gamma"], "bw": params["final_word"]["beta"],
        "ge": params["final_ent"]["gamma"], "be": params["final_ent"]["beta"],
    }
    return {"word": fuse_att(params["word_att"], params["word_self_output"], hd),
            "ent": fuse_att(params["ent_att"], params["ent_self_output"], ed),
            "tail": tail}


# ----------------------------- forward (kernel path) -------------------------

def adaption_layer_forward(kparams, doc, ent, mask, mask_ent, num_heads, *,
                           vmem_limit_bytes=None):
    B, S, _ = doc.shape
    Se = ent.shape[1]
    # `~mask * -10000.0` head/query expansion, collapsed to an additive (B,1,S) bias.
    addm_word = jnp.where(mask, 0.0, -10000.0).astype(jnp.float32).reshape(B, 1, S)
    addm_ent = jnp.where(mask_ent, 0.0, -10000.0).astype(jnp.float32).reshape(B, 1, Se)

    word_attn = mha_self_output_forward(doc, addm_word, kparams["word"], num_heads,
                                        vmem_limit_bytes=vmem_limit_bytes)
    ent_attn = mha_self_output_forward(ent, addm_ent, kparams["ent"], num_heads,
                                       apply_row_mask=True,
                                       vmem_limit_bytes=vmem_limit_bytes)
    return intermediate_final_forward(word_attn, ent_attn, kparams["tail"],
                                      vmem_limit_bytes=vmem_limit_bytes)


# ----------------------------- pure-JAX reference ----------------------------

def _mha_ref(x, addm, p, num_heads):
    B, S, E = x.shape
    d = E // num_heads
    q = x @ p["wqt"] + p["bq"]
    k = x @ p["wkt"] + p["bk"]
    v = x @ p["wvt"] + p["bv"]
    qh = q.reshape(B, S, num_heads, d).transpose(0, 2, 1, 3) / math.sqrt(d)
    kh = k.reshape(B, S, num_heads, d).transpose(0, 2, 1, 3)
    vh = v.reshape(B, S, num_heads, d).transpose(0, 2, 1, 3)
    s = qh @ kh.transpose(0, 1, 3, 2) + addm[:, None, :, :]
    a = jax.nn.softmax(s, axis=-1)
    ctx = (a @ vh).transpose(0, 2, 1, 3).reshape(B, S, E)
    return ctx @ p["wot"] + p["bo"]


def _self_output_ref(x, res, p, eps=1e-5):
    y = x @ p["wt"] + p["b"] + res
    mu = y.mean(-1, keepdims=True)
    var = ((y - mu) ** 2).mean(-1, keepdims=True)
    return (y - mu) / jnp.sqrt(var + eps) * p["gamma"] + p["beta"]


def adaption_layer_ref(params, doc, ent, mask, mask_ent, num_heads):
    B, S, _ = doc.shape
    addm_word = jnp.where(mask, 0.0, -10000.0).astype(jnp.float32).reshape(B, 1, S)
    addm_ent = jnp.where(mask_ent, 0.0, -10000.0).astype(jnp.float32).reshape(B, 1, -1)
    wa = _mha_ref(doc, addm_word, params["word_att"], num_heads)
    wa = _self_output_ref(wa, doc, params["word_self_output"])
    ea = _mha_ref(ent, addm_ent, params["ent_att"], num_heads)
    ea = _self_output_ref(ea, ent, params["ent_self_output"])
    ea = ea * mask_ent.astype(jnp.float32)[..., None]
    h = (wa @ params["intermediate"]["wt"] + params["intermediate"]["b"]
         + ea @ params["intermediate_ent"]["wt"] + params["intermediate_ent"]["b"])
    h = 0.5 * h * (1.0 + lax.erf(h / math.sqrt(2.0)))
    return (_self_output_ref(h, wa, params["final_word"]),
            _self_output_ref(h, ea, params["final_ent"]))


# ----------------------------- main -------------------------------------------

if __name__ == "__main__":
    B, S = 2, 8
    hidden_dim, ent_hidden_dim, kg_intermediate_dim = 32, 16, 64
    num_heads = 4

    key = jax.random.PRNGKey(0)
    k_doc, k_ent, k_par = jax.random.split(key, 3)
    doc = jax.random.normal(k_doc, (B, S, hidden_dim), jnp.float32)
    ent = jax.random.normal(k_ent, (B, S, ent_hidden_dim), jnp.float32)
    # boolean masks (True = valid position), ragged lengths per batch
    mask = jnp.array([[True] * 8, [True] * 5 + [False] * 3])
    mask_ent = jnp.array([[True] * 6 + [False] * 2, [True] * 8])

    params = init_adaption_params(k_par, hidden_dim, ent_hidden_dim, kg_intermediate_dim)
    kparams = prepare_kernel_params(params, num_heads)      # one-time fusion, not per call

    out_word, out_ent = adaption_layer_forward(kparams, doc, ent, mask, mask_ent, num_heads)
    jax.block_until_ready((out_word, out_ent))

    ref_word, ref_ent = adaption_layer_ref(params, doc, ent, mask, mask_ent, num_heads)
    assert out_word.shape == (B, S, hidden_dim)
    assert out_ent.shape == (B, S, ent_hidden_dim)
    # Exact softmax normalization now (post-PV divide), so the tolerance is tight again.
    assert jnp.max(jnp.abs(out_word - ref_word)) < 2e-3
    assert jnp.max(jnp.abs(out_ent - ref_ent)) < 2e-3

    print("KERNEL_OK")
</pallas_src>

<mosaic_0001>
module attributes {stable_mosaic.version = 11 : i64} {
  func.func @_mha_self_output_kernel(%arg0: i32, %arg1: memref<1x8x32xf32, #tpu.memory_space<vmem>>, %arg2: memref<1x1x8xf32, #tpu.memory_space<vmem>>, %arg3: memref<32x96xf32, #tpu.memory_space<vmem>>, %arg4: memref<1x96xf32, #tpu.memory_space<vmem>>, %arg5: memref<32x32xf32, #tpu.memory_space<vmem>>, %arg6: memref<1x32xf32, #tpu.memory_space<vmem>>, %arg7: memref<32x32xf32, #tpu.memory_space<vmem>>, %arg8: memref<1x32xf32, #tpu.memory_space<vmem>>, %arg9: memref<1x32xf32, #tpu.memory_space<vmem>>, %arg10: memref<1x32xf32, #tpu.memory_space<vmem>>, %arg11: memref<1x8x32xf32, #tpu.memory_space<vmem>>) attributes {dimension_semantics = [#tpu.dimension_semantics<parallel>], iteration_bounds = array<i64: 2>, scalar_prefetch = 0 : i64, scratch_operands = 0 : i64, tpu.core_type = #tpu.core_type<tc>, window_params = [{transform_indices = @transform_0, window_bounds = array<i64: 1, 8, 32>}, {transform_indices = @transform_1, window_bounds = array<i64: 1, 1, 8>}, {pipeline_mode = #tpu.pipeline_mode<synchronous>, transform_indices = @transform_2, window_bounds = array<i64: 32, 96>}, {pipeline_mode = #tpu.pipeline_mode<synchronous>, transform_indices = @transform_3, window_bounds = array<i64: 1, 96>}, {pipeline_mode = #tpu.pipeline_mode<synchronous>, transform_indices = @transform_4, window_bounds = array<i64: 32, 32>}, {pipeline_mode = #tpu.pipeline_mode<synchronous>, transform_indices = @transform_5, window_bounds = array<i64: 1, 32>}, {pipeline_mode = #tpu.pipeline_mode<synchronous>, transform_indices = @transform_6, window_bounds = array<i64: 32, 32>}, {pipeline_mode = #tpu.pipeline_mode<synchronous>, transform_indices = @transform_7, window_bounds = array<i64: 1, 32>}, {pipeline_mode = #tpu.pipeline_mode<synchronous>, transform_indices = @transform_8, window_bounds = array<i64: 1, 32>}, {pipeline_mode = #tpu.pipeline_mode<synchronous>, transform_indices = @transform_9, window_bounds = array<i64: 1, 32>}, {transform_indices = @transform_10, window_bounds = array<i64: 1, 8, 32>}]} {
    %c0 = arith.constant 0 : index
    %c0_0 = arith.constant 0 : index
    %c0_1 = arith.constant 0 : index
    %0 = vector.load %arg1[%c0, %c0_0, %c0_1] : memref<1x8x32xf32, #tpu.memory_space<vmem>>, vector<1x8x32xf32>
    %1 = vector.shape_cast %0 : vector<1x8x32xf32> to vector<8x32xf32>
    %c0_2 = arith.constant 0 : index
    %c0_3 = arith.constant 0 : index
    %c0_4 = arith.constant 0 : index
    %2 = vector.load %arg2[%c0_2, %c0_3, %c0_4] : memref<1x1x8xf32, #tpu.memory_space<vmem>>, vector<1x1x8xf32>
    %3 = vector.shape_cast %2 : vector<1x1x8xf32> to vector<1x8xf32>
    %c0_5 = arith.constant 0 : index
    %c0_6 = arith.constant 0 : index
    %4 = vector.load %arg3[%c0_5, %c0_6] : memref<32x96xf32, #tpu.memory_space<vmem>>, vector<32x96xf32>
    %cst = arith.constant dense<0.000000e+00> : vector<8x96xf32>
    %5 = tpu.matmul %1, %4, %cst {dimension_numbers = #tpu.dot_dimension_numbers<[1], [0], [0], [1], [0, 0, 1, 1], [], []>} : vector<8x32xf32>, vector<32x96xf32>, vector<8x96xf32> -> vector<8x96xf32>
    %c0_7 = arith.constant 0 : index
    %c0_8 = arith.constant 0 : index
    %6 = vector.load %arg4[%c0_7, %c0_8] : memref<1x96xf32, #tpu.memory_space<vmem>>, vector<1x96xf32>
    %7 = vector.broadcast %6 : vector<1x96xf32> to vector<8x96xf32>
    %8 = arith.addf %5, %7 : vector<8x96xf32>
    %9 = vector.extract_strided_slice %8 {offsets = [0, 0], sizes = [8, 8], strides = [1, 1]} : vector<8x96xf32> to vector<8x8xf32>
    %10 = vector.extract_strided_slice %8 {offsets = [0, 32], sizes = [8, 8], strides = [1, 1]} : vector<8x96xf32> to vector<8x8xf32>
    %11 = vector.extract_strided_slice %8 {offsets = [0, 64], sizes = [8, 8], strides = [1, 1]} : vector<8x96xf32> to vector<8x8xf32>
    %cst_9 = arith.constant dense<0.000000e+00> : vector<8x8xf32>
    %12 = tpu.matmul %9, %10, %cst_9 {dimension_numbers = #tpu.dot_dimension_numbers<[1], [1], [0], [0], [0, 0, 1, 0], [], []>} : vector<8x8xf32>, vector<8x8xf32>, vector<8x8xf32> -> vector<8x8xf32>
    %13 = vector.broadcast %3 : vector<1x8xf32> to vector<8x8xf32>
    %14 = arith.addf %12, %13 : vector<8x8xf32>
    %cst_10 = arith.constant dense<0xFF800000> : vector<8xf32>
    %15 = vector.multi_reduction <maximumf>, %14, %cst_10 [1] : vector<8x8xf32> to vector<8xf32>
    %16 = vector.shape_cast %15 : vector<8xf32> to vector<8x1xf32>
    %17 = vector.broadcast %16 : vector<8x1xf32> to vector<8x8xf32>
    %18 = arith.subf %14, %17 : vector<8x8xf32>
    %19 = math.exp %18 : vector<8x8xf32>
    %cst_11 = arith.constant dense<0.000000e+00> : vector<8xf32>
    %20 = vector.multi_reduction <add>, %19, %cst_11 [1] : vector<8x8xf32> to vector<8xf32>
    %21 = vector.shape_cast %20 : vector<8xf32> to vector<8x1xf32>
    %cst_12 = arith.constant dense<0.000000e+00> : vector<8x8xf32>
    %22 = tpu.matmul %19, %11, %cst_12 {dimension_numbers = #tpu.dot_dimension_numbers<[1], [0], [0], [1], [0, 0, 1, 1], [], []>} : vector<8x8xf32>, vector<8x8xf32>, vector<8x8xf32> -> vector<8x8xf32>
    %23 = vector.broadcast %21 : vector<8x1xf32> to vector<8x8xf32>
    %24 = arith.divf %22, %23 : vector<8x8xf32>
    %25 = vector.extract_strided_slice %8 {offsets = [0, 8], sizes = [8, 8], strides = [1, 1]} : vector<8x96xf32> to vector<8x8xf32>
    %26 = vector.extract_strided_slice %8 {offsets = [0, 40], sizes = [8, 8], strides = [1, 1]} : vector<8x96xf32> to vector<8x8xf32>
    %27 = vector.extract_strided_slice %8 {offsets = [0, 72], sizes = [8, 8], strides = [1, 1]} : vector<8x96xf32> to vector<8x8xf32>
    %cst_13 = arith.constant dense<0.000000e+00> : vector<8x8xf32>
    %28 = tpu.matmul %25, %26, %cst_13 {dimension_numbers = #tpu.dot_dimension_numbers<[1], [1], [0], [0], [0, 0, 1, 0], [], []>} : vector<8x8xf32>, vector<8x8xf32>, vector<8x8xf32> -> vector<8x8xf32>
    %29 = vector.broadcast %3 : vector<1x8xf32> to vector<8x8xf32>
    %30 = arith.addf %28, %29 : vector<8x8xf32>
    %cst_14 = arith.constant dense<0xFF800000> : vector<8xf32>
    %31 = vector.multi_reduction <maximumf>, %30, %cst_14 [1] : vector<8x8xf32> to vector<8xf32>
    %32 = vector.shape_cast %31 : vector<8xf32> to vector<8x1xf32>
    %33 = vector.broadcast %32 : vector<8x1xf32> to vector<8x8xf32>
    %34 = arith.subf %30, %33 : vector<8x8xf32>
    %35 = math.exp %34 : vector<8x8xf32>
    %cst_15 = arith.constant dense<0.000000e+00> : vector<8xf32>
    %36 = vector.multi_reduction <add>, %35, %cst_15 [1] : vector<8x8xf32> to vector<8xf32>
    %37 = vector.shape_cast %36 : vector<8xf32> to vector<8x1xf32>
    %cst_16 = arith.constant dense<0.000000e+00> : vector<8x8xf32>
    %38 = tpu.matmul %35, %27, %cst_16 {dimension_numbers = #tpu.dot_dimension_numbers<[1], [0], [0], [1], [0, 0, 1, 1], [], []>} : vector<8x8xf32>, vector<8x8xf32>, vector<8x8xf32> -> vector<8x8xf32>
    %39 = vector.broadcast %37 : vector<8x1xf32> to vector<8x8xf32>
    %40 = arith.divf %38, %39 : vector<8x8xf32>
    %41 = vector.extract_strided_slice %8 {offsets = [0, 16], sizes = [8, 8], strides = [1, 1]} : vector<8x96xf32> to vector<8x8xf32>
    %42 = vector.extract_strided_slice %8 {offsets = [0, 48], sizes = [8, 8], strides = [1, 1]} : vector<8x96xf32> to vector<8x8xf32>
    %43 = vector.extract_strided_slice %8 {offsets = [0, 80], sizes = [8, 8], strides = [1, 1]} : vector<8x96xf32> to vector<8x8xf32>
    %cst_17 = arith.constant dense<0.000000e+00> : vector<8x8xf32>
    %44 = tpu.matmul %41, %42, %cst_17 {dimension_numbers = #tpu.dot_dimension_numbers<[1], [1], [0], [0], [0, 0, 1, 0], [], []>} : vector<8x8xf32>, vector<8x8xf32>, vector<8x8xf32> -> vector<8x8xf32>
    %45 = vector.broadcast %3 : vector<1x8xf32> to vector<8x8xf32>
    %46 = arith.addf %44, %45 : vector<8x8xf32>
    %cst_18 = arith.constant dense<0xFF800000> : vector<8xf32>
    %47 = vector.multi_reduction <maximumf>, %46, %cst_18 [1] : vector<8x8xf32> to vector<8xf32>
    %48 = vector.shape_cast %47 : vector<8xf32> to vector<8x1xf32>
    %49 = vector.broadcast %48 : vector<8x1xf32> to vector<8x8xf32>
    %50 = arith.subf %46, %49 : vector<8x8xf32>
    %51 = math.exp %50 : vector<8x8xf32>
    %cst_19 = arith.constant dense<0.000000e+00> : vector<8xf32>
    %52 = vector.multi_reduction <add>, %51, %cst_19 [1] : vector<8x8xf32> to vector<8xf32>
    %53 = vector.shape_cast %52 : vector<8xf32> to vector<8x1xf32>
    %cst_20 = arith.constant dense<0.000000e+00> : vector<8x8xf32>
    %54 = tpu.matmul %51, %43, %cst_20 {dimension_numbers = #tpu.dot_dimension_numbers<[1], [0], [0], [1], [0, 0, 1, 1], [], []>} : vector<8x8xf32>, vector<8x8xf32>, vector<8x8xf32> -> vector<8x8xf32>
    %55 = vector.broadcast %53 : vector<8x1xf32> to vector<8x8xf32>
    %56 = arith.divf %54, %55 : vector<8x8xf32>
    %57 = vector.extract_strided_slice %8 {offsets = [0, 24], sizes = [8, 8], strides = [1, 1]} : vector<8x96xf32> to vector<8x8xf32>
    %58 = vector.extract_strided_slice %8 {offsets = [0, 56], sizes = [8, 8], strides = [1, 1]} : vector<8x96xf32> to vector<8x8xf32>
    %59 = vector.extract_strided_slice %8 {offsets = [0, 88], sizes = [8, 8], strides = [1, 1]} : vector<8x96xf32> to vector<8x8xf32>
    %cst_21 = arith.constant dense<0.000000e+00> : vector<8x8xf32>
    %60 = tpu.matmul %57, %58, %cst_21 {dimension_numbers = #tpu.dot_dimension_numbers<[1], [1], [0], [0], [0, 0, 1, 0], [], []>} : vector<8x8xf32>, vector<8x8xf32>, vector<8x8xf32> -> vector<8x8xf32>
    %61 = vector.broadcast %3 : vector<1x8xf32> to vector<8x8xf32>
    %62 = arith.addf %60, %61 : vector<8x8xf32>
    %cst_22 = arith.constant dense<0xFF800000> : vector<8xf32>
    %63 = vector.multi_reduction <maximumf>, %62, %cst_22 [1] : vector<8x8xf32> to vector<8xf32>
    %64 = vector.shape_cast %63 : vector<8xf32> to vector<8x1xf32>
    %65 = vector.broadcast %64 : vector<8x1xf32> to vector<8x8xf32>
    %66 = arith.subf %62, %65 : vector<8x8xf32>
    %67 = math.exp %66 : vector<8x8xf32>
    %cst_23 = arith.constant dense<0.000000e+00> : vector<8xf32>
    %68 = vector.multi_reduction <add>, %67, %cst_23 [1] : vector<8x8xf32> to vector<8xf32>
    %69 = vector.shape_cast %68 : vector<8xf32> to vector<8x1xf32>
    %cst_24 = arith.constant dense<0.000000e+00> : vector<8x8xf32>
    %70 = tpu.matmul %67, %59, %cst_24 {dimension_numbers = #tpu.dot_dimension_numbers<[1], [0], [0], [1], [0, 0, 1, 1], [], []>} : vector<8x8xf32>, vector<8x8xf32>, vector<8x8xf32> -> vector<8x8xf32>
    %71 = vector.broadcast %69 : vector<8x1xf32> to vector<8x8xf32>
    %72 = arith.divf %70, %71 : vector<8x8xf32>
    %73 = tpu.concatenate %24, %40, %56, %72 in 1 : vector<8x8xf32>, vector<8x8xf32>, vector<8x8xf32>, vector<8x8xf32> -> vector<8x32xf32>
    %c0_25 = arith.constant 0 : index
    %c0_26 = arith.constant 0 : index
    %74 = vector.load %arg5[%c0_25, %c0_26] : memref<32x32xf32, #tpu.memory_space<vmem>>, vector<32x32xf32>
    %cst_27 = arith.constant dense<0.000000e+00> : vector<8x32xf32>
    %75 = tpu.matmul %73, %74, %cst_27 {dimension_numbers = #tpu.dot_dimension_numbers<[1], [0], [0], [1], [0, 0, 1, 1], [], []>} : vector<8x32xf32>, vector<32x32xf32>, vector<8x32xf32> -> vector<8x32xf32>
    %c0_28 = arith.constant 0 : index
    %c0_29 = arith.constant 0 : index
    %76 = vector.load %arg6[%c0_28, %c0_29] : memref<1x32xf32, #tpu.memory_space<vmem>>, vector<1x32xf32>
    %77 = vector.broadcast %76 : vector<1x32xf32> to vector<8x32xf32>
    %78 = arith.addf %75, %77 : vector<8x32xf32>
    %c0_30 = arith.constant 0 : index
    %c0_31 = arith.constant 0 : index
    %79 = vector.load %arg7[%c0_30, %c0_31] : memref<32x32xf32, #tpu.memory_space<vmem>>, vector<32x32xf32>
    %cst_32 = arith.constant dense<0.000000e+00> : vector<8x32xf32>
    %80 = tpu.matmul %78, %79, %cst_32 {dimension_numbers = #tpu.dot_dimension_numbers<[1], [0], [0], [1], [0, 0, 1, 1], [], []>} : vector<8x32xf32>, vector<32x32xf32>, vector<8x32xf32> -> vector<8x32xf32>
    %c0_33 = arith.constant 0 : index
    %c0_34 = arith.constant 0 : index
    %81 = vector.load %arg8[%c0_33, %c0_34] : memref<1x32xf32, #tpu.memory_space<vmem>>, vector<1x32xf32>
    %82 = vector.broadcast %81 : vector<1x32xf32> to vector<8x32xf32>
    %83 = arith.addf %80, %82 : vector<8x32xf32>
    %84 = arith.addf %83, %1 : vector<8x32xf32>
    %c0_35 = arith.constant 0 : index
    %c0_36 = arith.constant 0 : index
    %85 = vector.load %arg9[%c0_35, %c0_36] : memref<1x32xf32, #tpu.memory_space<vmem>>, vector<1x32xf32>
    %c0_37 = arith.constant 0 : index
    %c0_38 = arith.constant 0 : index
    %86 = vector.load %arg10[%c0_37, %c0_38] : memref<1x32xf32, #tpu.memory_space<vmem>>, vector<1x32xf32>
    %cst_39 = arith.constant dense<0.000000e+00> : vector<8xf32>
    %87 = vector.multi_reduction <add>, %84, %cst_39 [1] : vector<8x32xf32> to vector<8xf32>
    %88 = vector.shape_cast %87 : vector<8xf32> to vector<8x1xf32>
    %cst_40 = arith.constant 3.200000e+01 : f32
    %89 = vector.broadcast %cst_40 : f32 to vector<8x1xf32>
    %90 = arith.divf %88, %89 : vector<8x1xf32>
    %91 = vector.broadcast %90 : vector<8x1xf32> to vector<8x32xf32>
    %92 = arith.subf %84, %91 : vector<8x32xf32>
    %93 = arith.mulf %92, %92 : vector<8x32xf32>
    %cst_41 = arith.constant dense<0.000000e+00> : vector<8xf32>
    %94 = vector.multi_reduction <add>, %93, %cst_41 [1] : vector<8x32xf32> to vector<8xf32>
    %95 = vector.shape_cast %94 : vector<8xf32> to vector<8x1xf32>
    %cst_42 = arith.constant 3.200000e+01 : f32
    %96 = vector.broadcast %cst_42 : f32 to vector<8x1xf32>
    %97 = arith.divf %95, %96 : vector<8x1xf32>
    %cst_43 = arith.constant 9.99999974E-6 : f32
    %98 = vector.broadcast %cst_43 : f32 to vector<8x1xf32>
    %99 = arith.addf %97, %98 : vector<8x1xf32>
    %100 = math.rsqrt %99 : vector<8x1xf32>
    %101 = vector.broadcast %100 : vector<8x1xf32> to vector<8x32xf32>
    %102 = arith.mulf %92, %101 : vector<8x32xf32>
    %103 = vector.broadcast %85 : vector<1x32xf32> to vector<8x32xf32>
    %104 = arith.mulf %102, %103 : vector<8x32xf32>
    %105 = vector.broadcast %86 : vector<1x32xf32> to vector<8x32xf32>
    %106 = arith.addf %104, %105 : vector<8x32xf32>
    %c0_44 = arith.constant 0 : index
    %c0_45 = arith.constant 0 : index
    %c0_46 = arith.constant 0 : index
    %107 = vector.load %arg11[%c0_44, %c0_45, %c0_46] : memref<1x8x32xf32, #tpu.memory_space<vmem>>, vector<1x8x32xf32>
    %108 = vector.shape_cast %107 : vector<1x8x32xf32> to vector<8x32xf32>
    %109 = vector.shape_cast %106 : vector<8x32xf32> to vector<1x8x32xf32>
    tpu.vector_store %arg11[%c0_44, %c0_45, %c0_46], %109 {strides = array<i32>} : memref<1x8x32xf32, #tpu.memory_space<vmem>>, vector<1x8x32xf32>,
    return
  }
  func.func @transform_0(%arg0: i32) -> (i32, i32, i32) {
    %c0_i32 = arith.constant 0 : i32
    %c0_i32_0 = arith.constant 0 : i32
    %c0_i32_1 = arith.constant 0 : i32
    return %arg0, %c0_i32, %c0_i32_0 : i32, i32, i32
  }
  func.func @transform_1(%arg0: i32) -> (i32, i32, i32) {
    %c0_i32 = arith.constant 0 : i32
    %c0_i32_0 = arith.constant 0 : i32
    %c0_i32_1 = arith.constant 0 : i32
    return %arg0, %c0_i32, %c0_i32_0 : i32, i32, i32
  }
  func.func @transform_2(%arg0: i32) -> (i32, i32) {
    %c0_i32 = arith.constant 0 : i32
    %c0_i32_0 = arith.constant 0 : i32
    %c0_i32_1 = arith.constant 0 : i32
    return %c0_i32, %c0_i32_0 : i32, i32
  }
  func.func @transform_3(%arg0: i32) -> (i32, i32) {
    %c0_i32 = arith.constant 0 : i32
    %c0_i32_0 = arith.constant 0 : i32
    %c0_i32_1 = arith.constant 0 : i32
    return %c0_i32, %c0_i32_0 : i32, i32
  }
  func.func @transform_4(%arg0: i32) -> (i32, i32) {
    %c0_i32 = arith.constant 0 : i32
    %c0_i32_0 = arith.constant 0 : i32
    %c0_i32_1 = arith.constant 0 : i32
    return %c0_i32, %c0_i32_0 : i32, i32
  }
  func.func @transform_5(%arg0: i32) -> (i32, i32) {
    %c0_i32 = arith.constant 0 : i32
    %c0_i32_0 = arith.constant 0 : i32
    %c0_i32_1 = arith.constant 0 : i32
    return %c0_i32, %c0_i32_0 : i32, i32
  }
  func.func @transform_6(%arg0: i32) -> (i32, i32) {
    %c0_i32 = arith.constant 0 : i32
    %c0_i32_0 = arith.constant 0 : i32
    %c0_i32_1 = arith.constant 0 : i32
    return %c0_i32, %c0_i32_0 : i32, i32
  }
  func.func @transform_7(%arg0: i32) -> (i32, i32) {
    %c0_i32 = arith.constant 0 : i32
    %c0_i32_0 = arith.constant 0 : i32
    %c0_i32_1 = arith.constant 0 : i32
    return %c0_i32, %c0_i32_0 : i32, i32
  }
  func.func @transform_8(%arg0: i32) -> (i32, i32) {
    %c0_i32 = arith.constant 0 : i32
    %c0_i32_0 = arith.constant 0 : i32
    %c0_i32_1 = arith.constant 0 : i32
    return %c0_i32, %c0_i32_0 : i32, i32
  }
  func.func @transform_9(%arg0: i32) -> (i32, i32) {
    %c0_i32 = arith.constant 0 : i32
    %c0_i32_0 = arith.constant 0 : i32
    %c0_i32_1 = arith.constant 0 : i32
    return %c0_i32, %c0_i32_0 : i32, i32
  }
  func.func @transform_10(%arg0: i32) -> (i32, i32, i32) {
    %c0_i32 = arith.constant 0 : i32
    %c0_i32_0 = arith.constant 0 : i32
    %c0_i32_1 = arith.constant 0 : i32
    return %arg0, %c0_i32, %c0_i32_0 : i32, i32, i32
  }
}

</mosaic_0001>

<llo_original>
// kernel: tpu_custom_call.1
$region0: #{tpu_custom_call.1}
  #allocation0 [shape = 'u32[]', space=smem, size = 0x4, offset = 0x4, fixed_abs, tag = 'smem constant byte address 0x4 - core index']
  #allocation1 [shape = 'u32[144,128]{1,0:T(1,128)}', space=vmem, size = 0x12000, scoped, tag = 'internal scratch']
  %s0 = inlined_call_operand.hbm [shape: f32[2,8,32], index: 0, kind: input, shape index: {}]
  %s1 = inlined_call_operand.hbm [shape: f32[2,1,8], index: 1, kind: input, shape index: {}]
  %s2 = inlined_call_operand.hbm [shape: f32[32,96], index: 2, kind: input, shape index: {}]
  %s3 = inlined_call_operand.vmem [shape: f32[1,96], index: 3, kind: input, shape index: {}]
  %s4 = inlined_call_operand.hbm [shape: f32[32,32], index: 4, kind: input, shape index: {}]
  %s5 = inlined_call_operand.vmem [shape: f32[1,32], index: 5, kind: input, shape index: {}]
  %s6 = inlined_call_operand.hbm [shape: f32[32,32], index: 6, kind: input, shape index: {}]
  %s7 = inlined_call_operand.vmem [shape: f32[1,32], index: 7, kind: input, shape index: {}]
  %s8 = inlined_call_operand.vmem [shape: f32[1,32], index: 8, kind: input, shape index: {}]
  %s9 = inlined_call_operand.vmem [shape: f32[1,32], index: 9, kind: input, shape index: {}]
  %s10 = inlined_call_operand.hbm [shape: f32[2,8,32], index: 10, kind: output, shape index: {}]
  %s11 = sld [smem:[#allocation0]]
  $region93: #{tpu_custom_call.1} parent=0
    _
  %s13 = ssub.s32 1, %s11
  %s14 = scalar_select 0, %s13, %s11
  $region1: #{tpu_custom_call.1} parent=0
    #allocation2 [shape = 'u8[8192]{0}', space=vmem, size = 0x2000, scoped, tag = 'input window, operand 0']
    #allocation3 [shape = 's32[2]{0}', space=sflag, size = 0x8, scoped, tag = 'scoped memory for tpu_custom_call.1']
    #allocation4 [shape = 's32[2]{0}', space=sflag, size = 0x8, scoped, tag = 'scoped memory for tpu_custom_call.1']
    #allocation5 [shape = 'u8[1024]{0}', space=vmem, size = 0x400, scoped, tag = 'input window, operand 1']
    #allocation6 [shape = 's32[2]{0}', space=sflag, size = 0x8, scoped, tag = 'scoped memory for tpu_custom_call.1']
    #allocation7 [shape = 'u8[16384]{0}', space=vmem, size = 0x4000, scoped, tag = 'input window, operand 2, single buffered']
    #allocation8 [shape = 'u8[16384]{0}', space=vmem, size = 0x4000, scoped, tag = 'input window, operand 4, single buffered']
    #allocation9 [shape = 's32[1]{0}', space=sflag, size = 0x4, scoped, tag = 'scoped memory for tpu_custom_call.1']
    #allocation10 [shape = 'u8[16384]{0}', space=vmem, size = 0x4000, scoped, tag = 'input window, operand 6, single buffered']
    #allocation11 [shape = 'u8[8192]{0}', space=vmem, size = 0x2000, scoped, tag = 'output window, operand 0']
    %15 = vsyncpa [#allocation3], 0
    %s16 = scalar_lea.sflag [#allocation3], 1
    %17 = vsyncpa %s16, 0
    %18 = vsyncpa [#allocation6], 0
    %s19 = scalar_lea.sflag [#allocation6], 1
    %20 = vsyncpa %s19, 0
    %21 = vsyncpa [#allocation9], 0
    %22 = vsyncpa [#allocation4], 0
    %s23 = scalar_lea.sflag [#allocation4], 1
    %24 = vsyncpa %s23, 0
    loop: start=0, step=1, limit=4
    $region2: #{tpu_custom_call.1} parent=1 // loop_pre_header
      _
    $region3: #{tpu_custom_call.1} parent=1 // loop_header
      %s26 = sphi 0, %s30
      %p27 = scmp.ge.s32.totalorder %s26, 4
      %s36 = sphi 0, %s38
      %s39 = sphi 0, %s36
      %s40 = sphi 0, %s39
      %s56 = sphi 0, %s40
      %s62 = sphi 0, %s64
      %s65 = sphi 0, %s62
      %s66 = sphi 0, %s65
      %s82 = sphi 0, %s66
      %s86 = sphi 0, %s86
      %s88 = sphi 0, %s86
      %s89 = sphi 0, %s88
      %s103 = sphi 0, %s89
      %s107 = sphi 0, %s107
      %s109 = sphi 0, %s107
      %s110 = sphi 0, %s109
      %s124 = sphi 0, %s110
      %s128 = sphi 0, %s128
      %s130 = sphi 0, %s128
      %s131 = sphi 0, %s130
      %s145 = sphi 0, %s131
      %s149 = sphi 0, %s149
      %s151 = sphi 0, %s149
      %s152 = sphi 0, %s151
      %s166 = sphi 0, %s152
      %s170 = sphi 0, %s170
      %s172 = sphi 0, %s170
      %s173 = sphi 0, %s172
      %s187 = sphi 0, %s173
      %s191 = sphi 0, %s191
      %s193 = sphi 0, %s191
      %s194 = sphi 0, %s193
      %s208 = sphi 0, %s194
      %s212 = sphi 0, %s212
      %s214 = sphi 0, %s212
      %s215 = sphi 0, %s214
      %s229 = sphi 0, %s215
      %s233 = sphi 0, %s233
      %s235 = sphi 0, %s233
      %s236 = sphi 0, %s235
      %s250 = sphi 0, %s236
      %s256 = sphi 0, %s258
      %s259 = sphi 0, %s256
      %s260 = sphi 0, %s259
      %s276 = sphi 0, %s260
    $region4: #{tpu_custom_call.1} parent=1 // loop_header_branch
      %29 = sbr.rel (%p27) target = $region8
    $region5: #{tpu_custom_call.1} parent=1 // loop_body
      %s31 = ssub.s32 %s26, 1
      %s32 = ssub.s32 %s26, 2
      %s33 = sadd.s32 %s26, 1
      %s34 = ssub.s32 %s26, %s33
      %p35 = scmp.eq.s32.totalorder %s34, 0
      %s37 = sadd.s32 %s36, 1
      %s38 = scalar_select %p35, %s36, %s37
      %p41 = pneg %p35
      %p42 = scmp.eq.s32.totalorder %s26, 1
      %p43 = por %p41, %p42
      %p44 = scmp.ne.s32.totalorder %s36, %s39
      %p45 = scmp.eq.s32.totalorder %s26, 0
      %p46 = por %p44, %p45
      %p47 = scmp.ne.s32.totalorder %s36, %s39
      %p48 = scmp.eq.s32.totalorder %s31, 1
      %p49 = por %p47, %p48
      %p50 = scmp.ne.s32.totalorder %s39, %s40
      %p51 = scmp.eq.s32.totalorder %s31, 0
      %p52 = por %p50, %p51
      %p53 = scmp.ne.s32.totalorder %s39, %s40
      %p54 = scmp.eq.s32.totalorder %s32, 1
      %p55 = por %p53, %p54
      %p57 = scmp.ne.s32.totalorder %s40, %s56
      %p58 = scmp.eq.s32.totalorder %s32, 0
      %p59 = por %p57, %p58
      %s60 = ssub.s32 %s26, %s33
      %p61 = scmp.eq.s32.totalorder %s60, 0
      %s63 = sadd.s32 %s62, 1
      %s64 = scalar_select %p61, %s62, %s63
      %p67 = pneg %p61
      %p68 = scmp.eq.s32.totalorder %s26, 1
      %p69 = por %p67, %p68
      %p70 = scmp.ne.s32.totalorder %s62, %s65
      %p71 = scmp.eq.s32.totalorder %s26, 0
      %p72 = por %p70, %p71
      %p73 = scmp.ne.s32.totalorder %s62, %s65
      %p74 = scmp.eq.s32.totalorder %s31, 1
      %p75 = por %p73, %p74
      %p76 = scmp.ne.s32.totalorder %s65, %s66
      %p77 = scmp.eq.s32.totalorder %s31, 0
      %p78 = por %p76, %p77
      %p79 = scmp.ne.s32.totalorder %s65, %s66
      %p80 = scmp.eq.s32.totalorder %s32, 1
      %p81 = por %p79, %p80
      %p83 = scmp.ne.s32.totalorder %s66, %s82
      %p84 = scmp.eq.s32.totalorder %s32, 0
      %p85 = por %p83, %p84
      %s87 = sadd.s32 %s86, 1
      %p90 = scmp.eq.s32.totalorder %s26, 1
      %p91 = scmp.ne.s32.totalorder %s86, %s88
      %p92 = scmp.eq.s32.totalorder %s26, 0
      %p93 = por %p91, %p92
      %p94 = scmp.ne.s32.totalorder %s86, %s88
      %p95 = scmp.eq.s32.totalorder %s31, 1
      %p96 = por %p94, %p95
      %p97 = scmp.ne.s32.totalorder %s88, %s89
      %p98 = scmp.eq.s32.totalorder %s31, 0
      %p99 = por %p97, %p98
      %p100 = scmp.ne.s32.totalorder %s88, %s89
      %p101 = scmp.eq.s32.totalorder %s32, 1
      %p102 = por %p100, %p101
      %p104 = scmp.ne.s32.totalorder %s89, %s103
      %p105 = scmp.eq.s32.totalorder %s32, 0
      %p106 = por %p104, %p105
      %s108 = sadd.s32 %s107, 1
      %p111 = scmp.eq.s32.totalorder %s26, 1
      %p112 = scmp.ne.s32.totalorder %s107, %s109
      %p113 = scmp.eq.s32.totalorder %s26, 0
      %p114 = por %p112, %p113
      %p115 = scmp.ne.s32.totalorder %s107, %s109
      %p116 = scmp.eq.s32.totalorder %s31, 1
      %p117 = por %p115, %p116
      %p118 = scmp.ne.s32.totalorder %s109, %s110
      %p119 = scmp.eq.s32.totalorder %s31, 0
      %p120 = por %p118, %p119
      %p121 = scmp.ne.s32.totalorder %s109, %s110
      %p122 = scmp.eq.s32.totalorder %s32, 1
      %p123 = por %p121, %p122
      %p125 = scmp.ne.s32.totalorder %s110, %s124
      %p126 = scmp.eq.s32.totalorder %s32, 0
      %p127 = por %p125, %p126
      %s129 = sadd.s32 %s128, 1
      %p132 = scmp.eq.s32.totalorder %s26, 1
      %p133 = scmp.ne.s32.totalorder %s128, %s130
      %p134 = scmp.eq.s32.totalorder %s26, 0
      %p135 = por %p133, %p134
      %p136 = scmp.ne.s32.totalorder %s128, %s130
      %p137 = scmp.eq.s32.totalorder %s31, 1
      %p138 = por %p136, %p137
      %p139 = scmp.ne.s32.totalorder %s130, %s131
      %p140 = scmp.eq.s32.totalorder %s31, 0
      %p141 = por %p139, %p140
      %p142 = scmp.ne.s32.totalorder %s130, %s131
      %p143 = scmp.eq.s32.totalorder %s32, 1
      %p144 = por %p142, %p143
      %p146 = scmp.ne.s32.totalorder %s131, %s145
      %p147 = scmp.eq.s32.totalorder %s32, 0
      %p148 = por %p146, %p147
      %s150 = sadd.s32 %s149, 1
      %p153 = scmp.eq.s32.totalorder %s26, 1
      %p154 = scmp.ne.s32.totalorder %s149, %s151
      %p155 = scmp.eq.s32.totalorder %s26, 0
      %p156 = por %p154, %p155
      %p157 = scmp.ne.s32.totalorder %s149, %s151
      %p158 = scmp.eq.s32.totalorder %s31, 1
      %p159 = por %p157, %p158
      %p160 = scmp.ne.s32.totalorder %s151, %s152
      %p161 = scmp.eq.s32.totalorder %s31, 0
      %p162 = por %p160, %p161
      %p163 = scmp.ne.s32.totalorder %s151, %s152
      %p164 = scmp.eq.s32.totalorder %s32, 1
      %p165 = por %p163, %p164
      %p167 = scmp.ne.s32.totalorder %s152, %s166
      %p168 = scmp.eq.s32.totalorder %s32, 0
      %p169 = por %p167, %p168
      %s171 = sadd.s32 %s170, 1
      %p174 = scmp.eq.s32.totalorder %s26, 1
      %p175 = scmp.ne.s32.totalorder %s170, %s172
      %p176 = scmp.eq.s32.totalorder %s26, 0
      %p177 = por %p175, %p176
      %p178 = scmp.ne.s32.totalorder %s170, %s172
      %p179 = scmp.eq.s32.totalorder %s31, 1
      %p180 = por %p178, %p179
      %p181 = scmp.ne.s32.totalorder %s172, %s173
      %p182 = scmp.eq.s32.totalorder %s31, 0
      %p183 = por %p181, %p182
      %p184 = scmp.ne.s32.totalorder %s172, %s173
      %p185 = scmp.eq.s32.totalorder %s32, 1
      %p186 = por %p184, %p185
      %p188 = scmp.ne.s32.totalorder %s173, %s187
      %p189 = scmp.eq.s32.totalorder %s32, 0
      %p190 = por %p188, %p189
      %s192 = sadd.s32 %s191, 1
      %p195 = scmp.eq.s32.totalorder %s26, 1
      %p196 = scmp.ne.s32.totalorder %s191, %s193
      %p197 = scmp.eq.s32.totalorder %s26, 0
      %p198 = por %p196, %p197
      %p199 = scmp.ne.s32.totalorder %s191, %s193
      %p200 = scmp.eq.s32.totalorder %s31, 1
      %p201 = por %p199, %p200
      %p202 = scmp.ne.s32.totalorder %s193, %s194
      %p203 = scmp.eq.s32.totalorder %s31, 0
      %p204 = por %p202, %p203
      %p205 = scmp.ne.s32.totalorder %s193, %s194
      %p206 = scmp.eq.s32.totalorder %s32, 1
      %p207 = por %p205, %p206
      %p209 = scmp.ne.s32.totalorder %s194, %s208
      %p210 = scmp.eq.s32.totalorder %s32, 0
      %p211 = por %p209, %p210
      %s213 = sadd.s32 %s212, 1
      %p216 = scmp.eq.s32.totalorder %s26, 1
      %p217 = scmp.ne.s32.totalorder %s212, %s214
      %p218 = scmp.eq.s32.totalorder %s26, 0
      %p219 = por %p217, %p218
      %p220 = scmp.ne.s32.totalorder %s212, %s214
      %p221 = scmp.eq.s32.totalorder %s31, 1
      %p222 = por %p220, %p221
      %p223 = scmp.ne.s32.totalorder %s214, %s215
      %p224 = scmp.eq.s32.totalorder %s31, 0
      %p225 = por %p223, %p224
      %p226 = scmp.ne.s32.totalorder %s214, %s215
      %p227 = scmp.eq.s32.totalorder %s32, 1
      %p228 = por %p226, %p227
      %p230 = scmp.ne.s32.totalorder %s215, %s229
      %p231 = scmp.eq.s32.totalorder %s32, 0
      %p232 = por %p230, %p231
      %s234 = sadd.s32 %s233, 1
      %p237 = scmp.eq.s32.totalorder %s26, 1
      %p238 = scmp.ne.s32.totalorder %s233, %s235
      %p239 = scmp.eq.s32.totalorder %s26, 0
      %p240 = por %p238, %p239
      %p241 = scmp.ne.s32.totalorder %s233, %s235
      %p242 = scmp.eq.s32.totalorder %s31, 1
      %p243 = por %p241, %p242
      %p244 = scmp.ne.s32.totalorder %s235, %s236
      %p245 = scmp.eq.s32.totalorder %s31, 0
      %p246 = por %p244, %p245
      %p247 = scmp.ne.s32.totalorder %s235, %s236
      %p248 = scmp.eq.s32.totalorder %s32, 1
      %p249 = por %p247, %p248
      %p251 = scmp.ne.s32.totalorder %s236, %s250
      %p252 = scmp.eq.s32.totalorder %s32, 0
      %p253 = por %p251, %p252
      %s254 = ssub.s32 %s26, %s33
      %p255 = scmp.eq.s32.totalorder %s254, 0
      %s257 = sadd.s32 %s256, 1
      %s258 = scalar_select %p255, %s256, %s257
      %p261 = pneg %p255
      %p262 = scmp.eq.s32.totalorder %s26, 1
      %p263 = por %p261, %p262
      %p264 = scmp.ne.s32.totalorder %s256, %s259
      %p265 = scmp.eq.s32.totalorder %s26, 0
      %p266 = por %p264, %p265
      %p267 = scmp.ne.s32.totalorder %s256, %s259
      %p268 = scmp.eq.s32.totalorder %s31, 1
      %p269 = por %p267, %p268
      %p270 = scmp.ne.s32.totalorder %s259, %s260
      %p271 = scmp.eq.s32.totalorder %s31, 0
      %p272 = por %p270, %p271
      %p273 = scmp.ne.s32.totalorder %s259, %s260
      %p274 = scmp.eq.s32.totalorder %s32, 1
      %p275 = por %p273, %p274
      %p277 = scmp.ne.s32.totalorder %s260, %s276
      %p278 = scmp.eq.s32.totalorder %s32, 0
      %p279 = por %p277, %p278
      %p280 = scmp.le.s32.totalorder 1, %s26
      %p281 = scmp.lt.s32.totalorder %s26, 3
      %p282 = pnand %p280, %p281
      %p283 = pneg %p282
      // Predicated region
      $region9: #{tpu_custom_call.1} parent=5 // pred_check
        _
      $region10: #{tpu_custom_call.1} parent=5 // pred_check_branch
        %285 = sbr.rel (%p282) target = $region12
      $region11: #{tpu_custom_call.1} parent=5 // pred_region
        %s286 = ssub.s32 %s26, 1
        // Predicated region
        $region13: #{tpu_custom_call.1} parent=11 // pred_check
          %p287 = pneg %p99
        $region14: #{tpu_custom_call.1} parent=11 // pred_check_branch
          %289 = sbr.rel (%p287) target = $region16
        $region15: #{tpu_custom_call.1} parent=11 // pred_region
          %s291 = ssub.s32 512, 512
          %292 = vsyncadd [#allocation6], %s291
          %s293 = sshll.u32 [#allocation7], 4
          %s294 = int_to_ptr.vmem [resolvable:$true] %s293
          %299 = dma.hbm_to_vmem [thread:$0]  %s2, 512, %s294, [#allocation6], 128, 128, 8
        $region16: #{tpu_custom_call.1} parent=11 // pred_fallthru
          _
        // Predicated region
        $region17: #{tpu_custom_call.1} parent=11 // pred_check
          %p300 = pneg %p120
        $region18: #{tpu_custom_call.1} parent=11 // pred_check_branch
          %302 = sbr.rel (%p300) target = $region20
        $region19: #{tpu_custom_call.1} parent=11 // pred_region
          _
        $region20: #{tpu_custom_call.1} parent=11 // pred_fallthru
          _
        // Predicated region
        $region21: #{tpu_custom_call.1} parent=11 // pred_check
          %p303 = pneg %p141
        $region22: #{tpu_custom_call.1} parent=11 // pred_check_branch
          %305 = sbr.rel (%p303) target = $region24
        $region23: #{tpu_custom_call.1} parent=11 // pred_region
          %s307 = ssub.s32 512, 512
          %308 = vsyncadd [#allocation9], %s307
          %s309 = sshll.u32 [#allocation8], 4
          %s310 = int_to_ptr.vmem [resolvable:$true] %s309
          %315 = dma.hbm_to_vmem [thread:$0]  %s4, 512, %s310, [#allocation9], 128, 128, 8
        $region24: #{tpu_custom_call.1} parent=11 // pred_fallthru
          _
        // Predicated region
        $region25: #{tpu_custom_call.1} parent=11 // pred_check
          %p316 = pneg %p162
        $region26: #{tpu_custom_call.1} parent=11 // pred_check_branch
          %318 = sbr.rel (%p316) target = $region28
        $region27: #{tpu_custom_call.1} parent=11 // pred_region
          _
        $region28: #{tpu_custom_call.1} parent=11 // pred_fallthru
          _
        // Predicated region
        $region29: #{tpu_custom_call.1} parent=11 // pred_check
          %p319 = pneg %p183
        $region30: #{tpu_custom_call.1} parent=11 // pred_check_branch
          %321 = sbr.rel (%p319) target = $region32
        $region31: #{tpu_custom_call.1} parent=11 // pred_region
          %s323 = ssub.s32 512, 512
          %324 = vsyncadd [#allocation9], %s323
          %s325 = sshll.u32 [#allocation10], 4
          %s326 = int_to_ptr.vmem [resolvable:$true] %s325
          %331 = dma.hbm_to_vmem [thread:$0]  %s6, 512, %s326, [#allocation9], 128, 128, 8
        $region32: #{tpu_custom_call.1} parent=11 // pred_fallthru
          _
        // Predicated region
        $region33: #{tpu_custom_call.1} parent=11 // pred_check
          %p332 = pneg %p204
        $region34: #{tpu_custom_call.1} parent=11 // pred_check_branch
          %334 = sbr.rel (%p332) target = $region36
        $region35: #{tpu_custom_call.1} parent=11 // pred_region
          _
        $region36: #{tpu_custom_call.1} parent=11 // pred_fallthru
          _
        // Predicated region
        $region37: #{tpu_custom_call.1} parent=11 // pred_check
          %p335 = pneg %p225
        $region38: #{tpu_custom_call.1} parent=11 // pred_check_branch
          %337 = sbr.rel (%p335) target = $region40
        $region39: #{tpu_custom_call.1} parent=11 // pred_region
          _
        $region40: #{tpu_custom_call.1} parent=11 // pred_fallthru
          _
        // Predicated region
        $region41: #{tpu_custom_call.1} parent=11 // pred_check
          %p338 = pneg %p246
        $region42: #{tpu_custom_call.1} parent=11 // pred_check_branch
          %340 = sbr.rel (%p338) target = $region44
        $region43: #{tpu_custom_call.1} parent=11 // pred_region
          _
        $region44: #{tpu_custom_call.1} parent=11 // pred_fallthru
          _
      $region12: #{tpu_custom_call.1} parent=5 // pred_fallthru
        _
      %p341 = scmp.lt.s32.totalorder %s26, 2
      // Predicated region
      $region45: #{tpu_custom_call.1} parent=5 // pred_check
        %p342 = pneg %p341
      $region46: #{tpu_custom_call.1} parent=5 // pred_check_branch
        %344 = sbr.rel (%p342) target = $region48
      $region47: #{tpu_custom_call.1} parent=5 // pred_region
        // Predicated region
        $region49: #{tpu_custom_call.1} parent=47 // pred_check
          %p345 = pneg %p46
        $region50: #{tpu_custom_call.1} parent=47 // pred_check_branch
          %347 = sbr.rel (%p345) target = $region52
        $region51: #{tpu_custom_call.1} parent=47 // pred_region
          %s348 = sand.u32 %s36, 1
          %s349 = scalar_lea.sflag [#allocation3], %s348
          %s350 = sand.u32 %s36, 1
          %s351 = smul.addr %s350, 8
          %s352 = scalar_lea.vmem [#allocation2], %s351
          %s354 = ssub.s32 128, 128
          %355 = vsyncadd %s349, %s354
          %s356 = smul.addr %s26, 128
          %s357 = scalar_lea.hbm %s0, %s356
          %s359 = sshll.u32 %s352, 4
          %s360 = int_to_ptr.vmem [resolvable:$true] %s359
          %362 = dma.hbm_to_vmem [thread:$0]  %s357, 128, %s360, %s349
        $region52: #{tpu_custom_call.1} parent=47 // pred_fallthru
          _
        // Predicated region
        $region53: #{tpu_custom_call.1} parent=47 // pred_check
          %p363 = pneg %p72
        $region54: #{tpu_custom_call.1} parent=47 // pred_check_branch
          %365 = sbr.rel (%p363) target = $region56
        $region55: #{tpu_custom_call.1} parent=47 // pred_region
          %s366 = sand.u32 %s26, 1
          %s367 = scalar_lea.sflag [#allocation6], %s366
          %s368 = sand.u32 %s62, 1
          %s369 = scalar_lea.vmem [#allocation5], %s368
          %s371 = ssub.s32 16, 16
          %372 = vsyncadd %s367, %s371
          %s373 = smul.addr %s26, 16
          %s374 = scalar_lea.hbm %s1, %s373
          %s376 = sshll.u32 %s369, 4
          %s377 = int_to_ptr.vmem [resolvable:$true] %s376
          %379 = dma.hbm_to_vmem [thread:$0]  %s374, 16, %s377, %s367
        $region56: #{tpu_custom_call.1} parent=47 // pred_fallthru
          _
      $region48: #{tpu_custom_call.1} parent=5 // pred_fallthru
        _
      %p380 = scmp.le.s32.totalorder 1, %s26
      %p381 = scmp.lt.s32.totalorder %s26, 3
      %p382 = pnand %p380, %p381
      %p383 = pneg %p382
      // Predicated region
      $region57: #{tpu_custom_call.1} parent=5 // pred_check
        _
      $region58: #{tpu_custom_call.1} parent=5 // pred_check_branch
        %385 = sbr.rel (%p382) target = $region60
      $region59: #{tpu_custom_call.1} parent=5 // pred_region
        %s386 = ssub.s32 %s26, 1
        %s387 = sand.u32 %s39, 1
        %s388 = scalar_lea.sflag [#allocation3], %s387
        %s389 = sand.u32 %s39, 1
        %s390 = smul.addr %s389, 8
        %s391 = scalar_lea.vmem [#allocation2], %s390
        // Predicated region
        $region61: #{tpu_custom_call.1} parent=59 // pred_check
          %p392 = pneg %p52
        $region62: #{tpu_custom_call.1} parent=59 // pred_check_branch
          %394 = sbr.rel (%p392) target = $region64
        $region63: #{tpu_custom_call.1} parent=59 // pred_region
          %395 = dma.done %s388, 128
        $region64: #{tpu_custom_call.1} parent=59 // pred_fallthru
          _
        %s396 = sand.u32 %s31, 1
        %s397 = scalar_lea.sflag [#allocation6], %s396
        %s398 = sand.u32 %s65, 1
        %s399 = scalar_lea.vmem [#allocation5], %s398
        // Predicated region
        $region65: #{tpu_custom_call.1} parent=59 // pred_check
          %p400 = pneg %p78
        $region66: #{tpu_custom_call.1} parent=59 // pred_check_branch
          %402 = sbr.rel (%p400) target = $region68
        $region67: #{tpu_custom_call.1} parent=59 // pred_region
          %403 = dma.done %s397, 16
        $region68: #{tpu_custom_call.1} parent=59 // pred_fallthru
          _
        // Predicated region
        $region69: #{tpu_custom_call.1} parent=59 // pred_check
          %p404 = pneg %p99
        $region70: #{tpu_custom_call.1} parent=59 // pred_check_branch
          %406 = sbr.rel (%p404) target = $region72
        $region71: #{tpu_custom_call.1} parent=59 // pred_region
          %407 = dma.done [#allocation6], 512
        $region72: #{tpu_custom_call.1} parent=59 // pred_fallthru
          _
        // Predicated region
        $region73: #{tpu_custom_call.1} parent=59 // pred_check
          %p408 = pneg %p141
        $region74: #{tpu_custom_call.1} parent=59 // pred_check_branch
          %410 = sbr.rel (%p408) target = $region76
        $region75: #{tpu_custom_call.1} parent=59 // pred_region
          %411 = dma.done [#allocation9], 512
        $region76: #{tpu_custom_call.1} parent=59 // pred_fallthru
          _
        // Predicated region
        $region77: #{tpu_custom_call.1} parent=59 // pred_check
          %p412 = pneg %p183
        $region78: #{tpu_custom_call.1} parent=59 // pred_check_branch
          %414 = sbr.rel (%p412) target = $region80
        $region79: #{tpu_custom_call.1} parent=59 // pred_region
          %415 = dma.done [#allocation9], 512
        $region80: #{tpu_custom_call.1} parent=59 // pred_fallthru
          _
        %s416 = sand.u32 %s39, 1
        %s417 = scalar_lea.sflag [#allocation3], %s416
        %s418 = sand.u32 %s39, 1
        %s419 = smul.addr %s418, 8
        %s420 = scalar_lea.vmem [#allocation2], %s419
        %p421 = pneg %p52
        %p422 = pneg %p49
        %s423 = sand.u32 %s31, 1
        %s424 = scalar_lea.sflag [#allocation6], %s423
        %s425 = sand.u32 %s65, 1
        %s426 = scalar_lea.vmem [#allocation5], %s425
        %p427 = pneg %p78
        %p428 = pneg %p75
        %p429 = pneg %p99
        %p430 = pneg %p96
        %p431 = pneg %p120
        %p432 = pneg %p117
        %p433 = pneg %p141
        %p434 = pneg %p138
        %p435 = pneg %p162
        %p436 = pneg %p159
        %p437 = pneg %p183
        %p438 = pneg %p180
        %p439 = pneg %p204
        %p440 = pneg %p201
        %p441 = pneg %p225
        %p442 = pneg %p222
        %p443 = pneg %p246
        %p444 = pneg %p243
        %p445 = pneg %p272
        %p446 = pneg %p269
        %s447 = sand.u32 %s259, 1
        %s448 = scalar_lea.sflag [#allocation4], %s447
        %s449 = sand.u32 %s259, 1
        %s450 = smul.addr %s449, 8
        %s451 = scalar_lea.vmem [#allocation11], %s450
        %v452 = vld [vmem:[%s391] sm:$0xff]
        %v453 = vld [vmem:[%s399] sm:$0x1]
        %v454 = vld [vmem:[#allocation7] sm:$0xff]
        %v455 = vld [vmem:[#allocation7 + $0x8] sm:$0xff]
        %v456 = vld [vmem:[#allocation7 + $0x10] sm:$0xff]
        %v457 = vld [vmem:[#allocation7 + $0x18] sm:$0xff]
        %v458 = vld [vmem:[%s3] sm:$0x1]
        %v460 = vlaneseq
        %v461 = vshrl.u32 %v460, 7
        %v462 = vsub.s32 0, %v461
        %v463 = vrot.slane %v458, %v462
        %vm465 = vcmask 261120
        %v467 = vsel %vm465, %v452, 0
        %469 = vmatprep.subr.mxu0 0.0
        %470 = vmatpush1.msra.mxu0 0.0
        %471 = vmatprep.subr.mxu0 0.0
        %472 = vmatpush1.msra.mxu0 0.0
        %473 = vmatprep.subr.mxu0 0.0
        %474 = vmatpush1.msra.mxu0 0.0
        %475 = vmatprep.subr.mxu0 0.0
        %476 = vmatpush1.msra.mxu0 0.0
        %477 = vmatprep.subr.mxu0 0.0
        %478 = vmatpush1.msra.mxu0 0.0
        %479 = vmatprep.subr.mxu0 0.0
        %480 = vmatpush1.msra.mxu0 0.0
        %481 = vmatprep.subr.mxu0 0.0
        %482 = vmatpush1.msra.mxu0 0.0
        %483 = vmatprep.subr.mxu0 0.0
        %484 = vmatpush1.msra.mxu0 0.0
        %485 = vmatprep.subr.mxu0 0.0
        %486 = vmatpush1.msra.mxu0 0.0
        %487 = vmatprep.subr.mxu0 0.0
        %488 = vmatpush1.msra.mxu0 0.0
        %489 = vmatprep.subr.mxu0 0.0
        %490 = vmatpush1.msra.mxu0 0.0
        %491 = vmatprep.subr.mxu0 0.0
        %492 = vmatpush1.msra.mxu0 0.0
        %493 = vmatprep.subr.mxu0 0.0
        %494 = vmatpush1.msra.mxu0 %v457
        %495 = vmatprep.subr.mxu0 0.0
        %496 = vmatpush1.msra.mxu0 %v456
        %497 = vmatprep.subr.mxu0 0.0
        %498 = vmatpush1.msra.mxu0 %v455
        %499 = vmatprep.subr.mxu0 0.0
        %500 = vmatpush1.msra.mxu0 %v454
        %501 = vmatprep.subr.mxu0 0.0
        %502 = vmatpush2.msra.mxu0 0.0
        %503 = vmatprep.subr.mxu0 0.0
        %504 = vmatpush2.msra.mxu0 0.0
        %505 = vmatprep.subr.mxu0 0.0
        %506 = vmatpush2.msra.mxu0 0.0
        %507 = vmatprep.subr.mxu0 0.0
        %508 = vmatpush2.msra.mxu0 0.0
        %509 = vmatprep.subr.mxu0 0.0
        %510 = vmatpush2.msra.mxu0 0.0
        %511 = vmatprep.subr.mxu0 0.0
        %512 = vmatpush2.msra.mxu0 0.0
        %513 = vmatprep.subr.mxu0 0.0
        %514 = vmatpush2.msra.mxu0 0.0
        %515 = vmatprep.subr.mxu0 0.0
        %516 = vmatpush2.msra.mxu0 0.0
        %517 = vmatprep.subr.mxu0 0.0
        %518 = vmatpush2.msra.mxu0 0.0
        %519 = vmatprep.subr.mxu0 0.0
        %520 = vmatpush2.msra.mxu0 0.0
        %521 = vmatprep.subr.mxu0 0.0
        %522 = vmatpush2.msra.mxu0 0.0
        %523 = vmatprep.subr.mxu0 0.0
        %524 = vmatpush2.msra.mxu0 0.0
        %525 = vmatprep.subr.mxu0 0.0
        %526 = vmatpush2.msra.mxu0 0.0
        %527 = vmatprep.subr.mxu0 0.0
        %528 = vmatpush2.msra.mxu0 0.0
        %529 = vmatprep.subr.mxu0 0.0
        %530 = vmatpush2.msra.mxu0 0.0
        %531 = vmatprep.subr.mxu0 0.0
        %532 = vmatpush2.msra.mxu0 0.0
        %533 = vmatprep.mubr.f32.mxu0 0.0
        %534 = vmatmul.mubr.f32.gmra.mxu0 %v467
        %v535 = vpop.f32.mrf.mxu0
        %v536 = vadd.f32 %v463, %v535
        %v537 = vpop.f32.mrf.mxu0
        %538 = vdwg.mxu0
        %v540 = vlaneseq
        %v541 = vshrl.u32 %v540, 7
        %v542 = vsub.s32 0, %v541
        %v543 = vrot.slane %v453, %v542
        %546 = vrot.lane.b32.xlu0 %v536, 96
        %v547 = vpop.permute.xlu0 %546
        %vm548 = vcmask 64512
        %v549 = vsel %vm548, %v536, 0
        %v551 = vsel %vm548, %v547, 0
        %553 = vmatprep.subr.mxu0 0.0
        %554 = vmatpush1.xpose.msra.mxu0 0.0
        %555 = vmatprep.subr.mxu0 0.0
        %556 = vmatpush1.xpose.msra.mxu0 0.0
        %557 = vmatprep.subr.mxu0 0.0
        %558 = vmatpush1.xpose.msra.mxu0 0.0
        %559 = vmatprep.subr.mxu0 0.0
        %560 = vmatpush1.xpose.msra.mxu0 0.0
        %561 = vmatprep.subr.mxu0 0.0
        %562 = vmatpush1.xpose.msra.mxu0 0.0
        %563 = vmatprep.subr.mxu0 0.0
        %564 = vmatpush1.xpose.msra.mxu0 0.0
        %565 = vmatprep.subr.mxu0 0.0
        %566 = vmatpush1.xpose.msra.mxu0 0.0
        %567 = vmatprep.subr.mxu0 0.0
        %568 = vmatpush1.xpose.msra.mxu0 0.0
        %569 = vmatprep.subr.mxu0 0.0
        %570 = vmatpush1.xpose.msra.mxu0 0.0
        %571 = vmatprep.subr.mxu0 0.0
        %572 = vmatpush1.xpose.msra.mxu0 0.0
        %573 = vmatprep.subr.mxu0 0.0
        %574 = vmatpush1.xpose.msra.mxu0 0.0
        %575 = vmatprep.subr.mxu0 0.0
        %576 = vmatpush1.xpose.msra.mxu0 0.0
        %577 = vmatprep.subr.mxu0 0.0
        %578 = vmatpush1.xpose.msra.mxu0 0.0
        %579 = vmatprep.subr.mxu0 0.0
        %580 = vmatpush1.xpose.msra.mxu0 0.0
        %581 = vmatprep.subr.mxu0 0.0
        %582 = vmatpush1.xpose.msra.mxu0 0.0
        %583 = vmatprep.subr.mxu0 0.0
        %584 = vmatpush1.xpose.msra.mxu0 %v551
        %585 = vmatprep.subr.mxu0 0.0
        %586 = vmatpush2.xpose.msra.mxu0 0.0
        %587 = vmatprep.subr.mxu0 0.0
        %588 = vmatpush2.xpose.msra.mxu0 0.0
        %589 = vmatprep.subr.mxu0 0.0
        %590 = vmatpush2.xpose.msra.mxu0 0.0
        %591 = vmatprep.subr.mxu0 0.0
        %592 = vmatpush2.xpose.msra.mxu0 0.0
        %593 = vmatprep.subr.mxu0 0.0
        %594 = vmatpush2.xpose.msra.mxu0 0.0
        %595 = vmatprep.subr.mxu0 0.0
        %596 = vmatpush2.xpose.msra.mxu0 0.0
        %597 = vmatprep.subr.mxu0 0.0
        %598 = vmatpush2.xpose.msra.mxu0 0.0
        %599 = vmatprep.subr.mxu0 0.0
        %600 = vmatpush2.xpose.msra.mxu0 0.0
        %601 = vmatprep.subr.mxu0 0.0
        %602 = vmatpush2.xpose.msra.mxu0 0.0
        %603 = vmatprep.subr.mxu0 0.0
        %604 = vmatpush2.xpose.msra.mxu0 0.0
        %605 = vmatprep.subr.mxu0 0.0
        %606 = vmatpush2.xpose.msra.mxu0 0.0
        %607 = vmatprep.subr.mxu0 0.0
        %608 = vmatpush2.xpose.msra.mxu0 0.0
        %609 = vmatprep.subr.mxu0 0.0
        %610 = vmatpush2.xpose.msra.mxu0 0.0
        %611 = vmatprep.subr.mxu0 0.0
        %612 = vmatpush2.xpose.msra.mxu0 0.0
        %613 = vmatprep.subr.mxu0 0.0
        %614 = vmatpush2.xpose.msra.mxu0 0.0
        %615 = vmatprep.subr.mxu0 0.0
        %616 = vmatpush2.xpose.msra.mxu0 0.0
        %617 = vmatprep.mubr.f32.mxu0 0.0
        %618 = vmatmul.mubr.f32.gmra.mxu0 %v549
        %v619 = vpop.f32.mrf.mxu0
        %v620 = vadd.f32 %v543, %v619
        %v621 = vpop.f32.mrf.mxu0
        %622 = vdwg.mxu0
        %v623 = vsel %vm548, %v620, -inf
        %624 = vmax.xlane.f32.xlu0 %v623
        %v625 = vpop.xlane.xlu0 %624
        %v626 = vsub.f32 %v620, %v625
        %v627 = vmul.f32 %v626, 1.442695
        %v628 = vpow.pop %v627
        %v629 = vsel %vm548, %v628, 0.0
        %630 = vadd.xlane.f32.xlu0 %v629
        %v631 = vpop.xlane.xlu0 %630
        %632 = vrot.lane.b32.xlu0 %v536, 64
        %v633 = vpop.permute.xlu0 %632
        %v636 = vsel %vm548, %v628, 0
        %638 = vmatprep.subr.mxu0 0.0
        %639 = vmatpush1.msra.mxu0 0.0
        %640 = vmatprep.subr.mxu0 0.0
        %641 = vmatpush1.msra.mxu0 0.0
        %642 = vmatprep.subr.mxu0 0.0
        %643 = vmatpush1.msra.mxu0 0.0
        %644 = vmatprep.subr.mxu0 0.0
        %645 = vmatpush1.msra.mxu0 0.0
        %646 = vmatprep.subr.mxu0 0.0
        %647 = vmatpush1.msra.mxu0 0.0
        %648 = vmatprep.subr.mxu0 0.0
        %649 = vmatpush1.msra.mxu0 0.0
        %650 = vmatprep.subr.mxu0 0.0
        %651 = vmatpush1.msra.mxu0 0.0
        %652 = vmatprep.subr.mxu0 0.0
        %653 = vmatpush1.msra.mxu0 0.0
        %654 = vmatprep.subr.mxu0 0.0
        %655 = vmatpush1.msra.mxu0 0.0
        %656 = vmatprep.subr.mxu0 0.0
        %657 = vmatpush1.msra.mxu0 0.0
        %658 = vmatprep.subr.mxu0 0.0
        %659 = vmatpush1.msra.mxu0 0.0
        %660 = vmatprep.subr.mxu0 0.0
        %661 = vmatpush1.msra.mxu0 0.0
        %662 = vmatprep.subr.mxu0 0.0
        %663 = vmatpush1.msra.mxu0 0.0
        %664 = vmatprep.subr.mxu0 0.0
        %665 = vmatpush1.msra.mxu0 0.0
        %666 = vmatprep.subr.mxu0 0.0
        %667 = vmatpush1.msra.mxu0 0.0
        %668 = vmatprep.subr.mxu0 0.0
        %669 = vmatpush1.msra.mxu0 %v633
        %670 = vmatprep.subr.mxu0 0.0
        %671 = vmatpush2.msra.mxu0 0.0
        %672 = vmatprep.subr.mxu0 0.0
        %673 = vmatpush2.msra.mxu0 0.0
        %674 = vmatprep.subr.mxu0 0.0
        %675 = vmatpush2.msra.mxu0 0.0
        %676 = vmatprep.subr.mxu0 0.0
        %677 = vmatpush2.msra.mxu0 0.0
        %678 = vmatprep.subr.mxu0 0.0
        %679 = vmatpush2.msra.mxu0 0.0
        %680 = vmatprep.subr.mxu0 0.0
        %681 = vmatpush2.msra.mxu0 0.0
        %682 = vmatprep.subr.mxu0 0.0
        %683 = vmatpush2.msra.mxu0 0.0
        %684 = vmatprep.subr.mxu0 0.0
        %685 = vmatpush2.msra.mxu0 0.0
        %686 = vmatprep.subr.mxu0 0.0
        %687 = vmatpush2.msra.mxu0 0.0
        %688 = vmatprep.subr.mxu0 0.0
        %689 = vmatpush2.msra.mxu0 0.0
        %690 = vmatprep.subr.mxu0 0.0
        %691 = vmatpush2.msra.mxu0 0.0
        %692 = vmatprep.subr.mxu0 0.0
        %693 = vmatpush2.msra.mxu0 0.0
        %694 = vmatprep.subr.mxu0 0.0
        %695 = vmatpush2.msra.mxu0 0.0
        %696 = vmatprep.subr.mxu0 0.0
        %697 = vmatpush2.msra.mxu0 0.0
        %698 = vmatprep.subr.mxu0 0.0
        %699 = vmatpush2.msra.mxu0 0.0
        %700 = vmatprep.subr.mxu0 0.0
        %701 = vmatpush2.msra.mxu0 0.0
        %702 = vmatprep.mubr.f32.mxu0 0.0
        %703 = vmatmul.mubr.f32.gmra.mxu0 %v636
        %v704 = vpop.f32.mrf.mxu0
        %v705 = vadd.f32 0.0, %v704
        %v706 = vpop.f32.mrf.mxu0
        %707 = vdwg.mxu0
        %v708 = vrcp.pop %v631
        %v709 = vmul.f32 %v705, %v708
        %710 = vrot.lane.b32.xlu0 %v536, 120
        %v711 = vpop.permute.xlu0 %710
        %712 = vrot.lane.b32.xlu0 %v536, 88
        %v713 = vpop.permute.xlu0 %712
        %v714 = vsel %vm548, %v711, 0
        %v716 = vsel %vm548, %v713, 0
        %718 = vmatprep.subr.mxu0 0.0
        %719 = vmatpush1.xpose.msra.mxu0 0.0
        %720 = vmatprep.subr.mxu0 0.0
        %721 = vmatpush1.xpose.msra.mxu0 0.0
        %722 = vmatprep.subr.mxu0 0.0
        %723 = vmatpush1.xpose.msra.mxu0 0.0
        %724 = vmatprep.subr.mxu0 0.0
        %725 = vmatpush1.xpose.msra.mxu0 0.0
        %726 = vmatprep.subr.mxu0 0.0
        %727 = vmatpush1.xpose.msra.mxu0 0.0
        %728 = vmatprep.subr.mxu0 0.0
        %729 = vmatpush1.xpose.msra.mxu0 0.0
        %730 = vmatprep.subr.mxu0 0.0
        %731 = vmatpush1.xpose.msra.mxu0 0.0
        %732 = vmatprep.subr.mxu0 0.0
        %733 = vmatpush1.xpose.msra.mxu0 0.0
        %734 = vmatprep.subr.mxu0 0.0
        %735 = vmatpush1.xpose.msra.mxu0 0.0
        %736 = vmatprep.subr.mxu0 0.0
        %737 = vmatpush1.xpose.msra.mxu0 0.0
        %738 = vmatprep.subr.mxu0 0.0
        %739 = vmatpush1.xpose.msra.mxu0 0.0
        %740 = vmatprep.subr.mxu0 0.0
        %741 = vmatpush1.xpose.msra.mxu0 0.0
        %742 = vmatprep.subr.mxu0 0.0
        %743 = vmatpush1.xpose.msra.mxu0 0.0
        %744 = vmatprep.subr.mxu0 0.0
        %745 = vmatpush1.xpose.msra.mxu0 0.0
        %746 = vmatprep.subr.mxu0 0.0
        %747 = vmatpush1.xpose.msra.mxu0 0.0
        %748 = vmatprep.subr.mxu0 0.0
        %749 = vmatpush1.xpose.msra.mxu0 %v716
        %750 = vmatprep.subr.mxu0 0.0
        %751 = vmatpush2.xpose.msra.mxu0 0.0
        %752 = vmatprep.subr.mxu0 0.0
        %753 = vmatpush2.xpose.msra.mxu0 0.0
        %754 = vmatprep.subr.mxu0 0.0
        %755 = vmatpush2.xpose.msra.mxu0 0.0
        %756 = vmatprep.subr.mxu0 0.0
        %757 = vmatpush2.xpose.msra.mxu0 0.0
        %758 = vmatprep.subr.mxu0 0.0
        %759 = vmatpush2.xpose.msra.mxu0 0.0
        %760 = vmatprep.subr.mxu0 0.0
        %761 = vmatpush2.xpose.msra.mxu0 0.0
        %762 = vmatprep.subr.mxu0 0.0
        %763 = vmatpush2.xpose.msra.mxu0 0.0
        %764 = vmatprep.subr.mxu0 0.0
        %765 = vmatpush2.xpose.msra.mxu0 0.0
        %766 = vmatprep.subr.mxu0 0.0
        %767 = vmatpush2.xpose.msra.mxu0 0.0
        %768 = vmatprep.subr.mxu0 0.0
        %769 = vmatpush2.xpose.msra.mxu0 0.0
        %770 = vmatprep.subr.mxu0 0.0
        %771 = vmatpush2.xpose.msra.mxu0 0.0
        %772 = vmatprep.subr.mxu0 0.0
        %773 = vmatpush2.xpose.msra.mxu0 0.0
        %774 = vmatprep.subr.mxu0 0.0
        %775 = vmatpush2.xpose.msra.mxu0 0.0
        %776 = vmatprep.subr.mxu0 0.0
        %777 = vmatpush2.xpose.msra.mxu0 0.0
        %778 = vmatprep.subr.mxu0 0.0
        %779 = vmatpush2.xpose.msra.mxu0 0.0
        %780 = vmatprep.subr.mxu0 0.0
        %781 = vmatpush2.xpose.msra.mxu0 0.0
        %782 = vmatprep.mubr.f32.mxu0 0.0
        %783 = vmatmul.mubr.f32.gmra.mxu0 %v714
        %v784 = vpop.f32.mrf.mxu0
        %v785 = vadd.f32 %v543, %v784
        %v786 = vpop.f32.mrf.mxu0
        %787 = vdwg.mxu0
        %v788 = vsel %vm548, %v785, -inf
        %789 = vmax.xlane.f32.xlu0 %v788
        %v790 = vpop.xlane.xlu0 %789
        %v791 = vsub.f32 %v785, %v790
        %v792 = vmul.f32 %v791, 1.442695
        %v793 = vpow.pop %v792
        %v794 = vsel %vm548, %v793, 0.0
        %795 = vadd.xlane.f32.xlu0 %v794
        %v796 = vpop.xlane.xlu0 %795
        %797 = vrot.lane.b32.xlu0 %v536, 56
        %v798 = vpop.permute.xlu0 %797
        %v801 = vsel %vm548, %v793, 0
        %803 = vmatprep.subr.mxu0 0.0
        %804 = vmatpush1.msra.mxu0 0.0
        %805 = vmatprep.subr.mxu0 0.0
        %806 = vmatpush1.msra.mxu0 0.0
        %807 = vmatprep.subr.mxu0 0.0
        %808 = vmatpush1.msra.mxu0 0.0
        %809 = vmatprep.subr.mxu0 0.0
        %810 = vmatpush1.msra.mxu0 0.0
        %811 = vmatprep.subr.mxu0 0.0
        %812 = vmatpush1.msra.mxu0 0.0
        %813 = vmatprep.subr.mxu0 0.0
        %814 = vmatpush1.msra.mxu0 0.0
        %815 = vmatprep.subr.mxu0 0.0
        %816 = vmatpush1.msra.mxu0 0.0
        %817 = vmatprep.subr.mxu0 0.0
        %818 = vmatpush1.msra.mxu0 0.0
        %819 = vmatprep.subr.mxu0 0.0
        %820 = vmatpush1.msra.mxu0 0.0
        %821 = vmatprep.subr.mxu0 0.0
        %822 = vmatpush1.msra.mxu0 0.0
        %823 = vmatprep.subr.mxu0 0.0
        %824 = vmatpush1.msra.mxu0 0.0
        %825 = vmatprep.subr.mxu0 0.0
        %826 = vmatpush1.msra.mxu0 0.0
        %827 = vmatprep.subr.mxu0 0.0
        %828 = vmatpush1.msra.mxu0 0.0
        %829 = vmatprep.subr.mxu0 0.0
        %830 = vmatpush1.msra.mxu0 0.0
        %831 = vmatprep.subr.mxu0 0.0
        %832 = vmatpush1.msra.mxu0 0.0
        %833 = vmatprep.subr.mxu0 0.0
        %834 = vmatpush1.msra.mxu0 %v798
        %835 = vmatprep.subr.mxu0 0.0
        %836 = vmatpush2.msra.mxu0 0.0
        %837 = vmatprep.subr.mxu0 0.0
        %838 = vmatpush2.msra.mxu0 0.0
        %839 = vmatprep.subr.mxu0 0.0
        %840 = vmatpush2.msra.mxu0 0.0
        %841 = vmatprep.subr.mxu0 0.0
        %842 = vmatpush2.msra.mxu0 0.0
        %843 = vmatprep.subr.mxu0 0.0
        %844 = vmatpush2.msra.mxu0 0.0
        %845 = vmatprep.subr.mxu0 0.0
        %846 = vmatpush2.msra.mxu0 0.0
        %847 = vmatprep.subr.mxu0 0.0
        %848 = vmatpush2.msra.mxu0 0.0
        %849 = vmatprep.subr.mxu0 0.0
        %850 = vmatpush2.msra.mxu0 0.0
        %851 = vmatprep.subr.mxu0 0.0
        %852 = vmatpush2.msra.mxu0 0.0
        %853 = vmatprep.subr.mxu0 0.0
        %854 = vmatpush2.msra.mxu0 0.0
        %855 = vmatprep.subr.mxu0 0.0
        %856 = vmatpush2.msra.mxu0 0.0
        %857 = vmatprep.subr.mxu0 0.0
        %858 = vmatpush2.msra.mxu0 0.0
        %859 = vmatprep.subr.mxu0 0.0
        %860 = vmatpush2.msra.mxu0 0.0
        %861 = vmatprep.subr.mxu0 0.0
        %862 = vmatpush2.msra.mxu0 0.0
        %863 = vmatprep.subr.mxu0 0.0
        %864 = vmatpush2.msra.mxu0 0.0
        %865 = vmatprep.subr.mxu0 0.0
        %866 = vmatpush2.msra.mxu0 0.0
        %867 = vmatprep.mubr.f32.mxu0 0.0
        %868 = vmatmul.mubr.f32.gmra.mxu0 %v801
        %v869 = vpop.f32.mrf.mxu0
        %v870 = vadd.f32 0.0, %v869
        %v871 = vpop.f32.mrf.mxu0
        %872 = vdwg.mxu0
        %v873 = vrcp.pop %v796
        %v874 = vmul.f32 %v870, %v873
        %875 = vrot.lane.b32.xlu0 %v536, 112
        %v876 = vpop.permute.xlu0 %875
        %877 = vrot.lane.b32.xlu0 %v536, 80
        %v878 = vpop.permute.xlu0 %877
        %v879 = vsel %vm548, %v876, 0
        %v881 = vsel %vm548, %v878, 0
        %883 = vmatprep.subr.mxu0 0.0
        %884 = vmatpush1.xpose.msra.mxu0 0.0
        %885 = vmatprep.subr.mxu0 0.0
        %886 = vmatpush1.xpose.msra.mxu0 0.0
        %887 = vmatprep.subr.mxu0 0.0
        %888 = vmatpush1.xpose.msra.mxu0 0.0
        %889 = vmatprep.subr.mxu0 0.0
        %890 = vmatpush1.xpose.msra.mxu0 0.0
        %891 = vmatprep.subr.mxu0 0.0
        %892 = vmatpush1.xpose.msra.mxu0 0.0
        %893 = vmatprep.subr.mxu0 0.0
        %894 = vmatpush1.xpose.msra.mxu0 0.0
        %895 = vmatprep.subr.mxu0 0.0
        %896 = vmatpush1.xpose.msra.mxu0 0.0
        %897 = vmatprep.subr.mxu0 0.0
        %898 = vmatpush1.xpose.msra.mxu0 0.0
        %899 = vmatprep.subr.mxu0 0.0
        %900 = vmatpush1.xpose.msra.mxu0 0.0
        %901 = vmatprep.subr.mxu0 0.0
        %902 = vmatpush1.xpose.msra.mxu0 0.0
        %903 = vmatprep.subr.mxu0 0.0
        %904 = vmatpush1.xpose.msra.mxu0 0.0
        %905 = vmatprep.subr.mxu0 0.0
        %906 = vmatpush1.xpose.msra.mxu0 0.0
        %907 = vmatprep.subr.mxu0 0.0
        %908 = vmatpush1.xpose.msra.mxu0 0.0
        %909 = vmatprep.subr.mxu0 0.0
        %910 = vmatpush1.xpose.msra.mxu0 0.0
        %911 = vmatprep.subr.mxu0 0.0
        %912 = vmatpush1.xpose.msra.mxu0 0.0
        %913 = vmatprep.subr.mxu0 0.0
        %914 = vmatpush1.xpose.msra.mxu0 %v881
        %915 = vmatprep.subr.mxu0 0.0
        %916 = vmatpush2.xpose.msra.mxu0 0.0
        %917 = vmatprep.subr.mxu0 0.0
        %918 = vmatpush2.xpose.msra.mxu0 0.0
        %919 = vmatprep.subr.mxu0 0.0
        %920 = vmatpush2.xpose.msra.mxu0 0.0
        %921 = vmatprep.subr.mxu0 0.0
        %922 = vmatpush2.xpose.msra.mxu0 0.0
        %923 = vmatprep.subr.mxu0 0.0
        %924 = vmatpush2.xpose.msra.mxu0 0.0
        %925 = vmatprep.subr.mxu0 0.0
        %926 = vmatpush2.xpose.msra.mxu0 0.0
        %927 = vmatprep.subr.mxu0 0.0
        %928 = vmatpush2.xpose.msra.mxu0 0.0
        %929 = vmatprep.subr.mxu0 0.0
        %930 = vmatpush2.xpose.msra.mxu0 0.0
        %931 = vmatprep.subr.mxu0 0.0
        %932 = vmatpush2.xpose.msra.mxu0 0.0
        %933 = vmatprep.subr.mxu0 0.0
        %934 = vmatpush2.xpose.msra.mxu0 0.0
        %935 = vmatprep.subr.mxu0 0.0
        %936 = vmatpush2.xpose.msra.mxu0 0.0
        %937 = vmatprep.subr.mxu0 0.0
        %938 = vmatpush2.xpose.msra.mxu0 0.0
        %939 = vmatprep.subr.mxu0 0.0
        %940 = vmatpush2.xpose.msra.mxu0 0.0
        %941 = vmatprep.subr.mxu0 0.0
        %942 = vmatpush2.xpose.msra.mxu0 0.0
        %943 = vmatprep.subr.mxu0 0.0
        %944 = vmatpush2.xpose.msra.mxu0 0.0
        %945 = vmatprep.subr.mxu0 0.0
        %946 = vmatpush2.xpose.msra.mxu0 0.0
        %947 = vmatprep.mubr.f32.mxu0 0.0
        %948 = vmatmul.mubr.f32.gmra.mxu0 %v879
        %v949 = vpop.f32.mrf.mxu0
        %v950 = vadd.f32 %v543, %v949
        %v951 = vpop.f32.mrf.mxu0
        %952 = vdwg.mxu0
        %v953 = vsel %vm548, %v950, -inf
        %954 = vmax.xlane.f32.xlu0 %v953
        %v955 = vpop.xlane.xlu0 %954
        %v956 = vsub.f32 %v950, %v955
        %v957 = vmul.f32 %v956, 1.442695
        %v958 = vpow.pop %v957
        %v959 = vsel %vm548, %v958, 0.0
        %960 = vadd.xlane.f32.xlu0 %v959
        %v961 = vpop.xlane.xlu0 %960
        %962 = vrot.lane.b32.xlu0 %v536, 48
        %v963 = vpop.permute.xlu0 %962
        %v966 = vsel %vm548, %v958, 0
        %968 = vmatprep.subr.mxu0 0.0
        %969 = vmatpush1.msra.mxu0 0.0
        %970 = vmatprep.subr.mxu0 0.0
        %971 = vmatpush1.msra.mxu0 0.0
        %972 = vmatprep.subr.mxu0 0.0
        %973 = vmatpush1.msra.mxu0 0.0
        %974 = vmatprep.subr.mxu0 0.0
        %975 = vmatpush1.msra.mxu0 0.0
        %976 = vmatprep.subr.mxu0 0.0
        %977 = vmatpush1.msra.mxu0 0.0
        %978 = vmatprep.subr.mxu0 0.0
        %979 = vmatpush1.msra.mxu0 0.0
        %980 = vmatprep.subr.mxu0 0.0
        %981 = vmatpush1.msra.mxu0 0.0
        %982 = vmatprep.subr.mxu0 0.0
        %983 = vmatpush1.msra.mxu0 0.0
        %984 = vmatprep.subr.mxu0 0.0
        %985 = vmatpush1.msra.mxu0 0.0
        %986 = vmatprep.subr.mxu0 0.0
        %987 = vmatpush1.msra.mxu0 0.0
        %988 = vmatprep.subr.mxu0 0.0
        %989 = vmatpush1.msra.mxu0 0.0
        %990 = vmatprep.subr.mxu0 0.0
        %991 = vmatpush1.msra.mxu0 0.0
        %992 = vmatprep.subr.mxu0 0.0
        %993 = vmatpush1.msra.mxu0 0.0
        %994 = vmatprep.subr.mxu0 0.0
        %995 = vmatpush1.msra.mxu0 0.0
        %996 = vmatprep.subr.mxu0 0.0
        %997 = vmatpush1.msra.mxu0 0.0
        %998 = vmatprep.subr.mxu0 0.0
        %999 = vmatpush1.msra.mxu0 %v963
        %1000 = vmatprep.subr.mxu0 0.0
        %1001 = vmatpush2.msra.mxu0 0.0
        %1002 = vmatprep.subr.mxu0 0.0
        %1003 = vmatpush2.msra.mxu0 0.0
        %1004 = vmatprep.subr.mxu0 0.0
        %1005 = vmatpush2.msra.mxu0 0.0
        %1006 = vmatprep.subr.mxu0 0.0
        %1007 = vmatpush2.msra.mxu0 0.0
        %1008 = vmatprep.subr.mxu0 0.0
        %1009 = vmatpush2.msra.mxu0 0.0
        %1010 = vmatprep.subr.mxu0 0.0
        %1011 = vmatpush2.msra.mxu0 0.0
        %1012 = vmatprep.subr.mxu0 0.0
        %1013 = vmatpush2.msra.mxu0 0.0
        %1014 = vmatprep.subr.mxu0 0.0
        %1015 = vmatpush2.msra.mxu0 0.0
        %1016 = vmatprep.subr.mxu0 0.0
        %1017 = vmatpush2.msra.mxu0 0.0
        %1018 = vmatprep.subr.mxu0 0.0
        %1019 = vmatpush2.msra.mxu0 0.0
        %1020 = vmatprep.subr.mxu0 0.0
        %1021 = vmatpush2.msra.mxu0 0.0
        %1022 = vmatprep.subr.mxu0 0.0
        %1023 = vmatpush2.msra.mxu0 0.0
        %1024 = vmatprep.subr.mxu0 0.0
        %1025 = vmatpush2.msra.mxu0 0.0
        %1026 = vmatprep.subr.mxu0 0.0
        %1027 = vmatpush2.msra.mxu0 0.0
        %1028 = vmatprep.subr.mxu0 0.0
        %1029 = vmatpush2.msra.mxu0 0.0
        %1030 = vmatprep.subr.mxu0 0.0
        %1031 = vmatpush2.msra.mxu0 0.0
        %1032 = vmatprep.mubr.f32.mxu0 0.0
        %1033 = vmatmul.mubr.f32.gmra.mxu0 %v966
        %v1034 = vpop.f32.mrf.mxu0
        %v1035 = vadd.f32 0.0, %v1034
        %v1036 = vpop.f32.mrf.mxu0
        %1037 = vdwg.mxu0
        %v1038 = vrcp.pop %v961
        %v1039 = vmul.f32 %v1035, %v1038
        %1040 = vrot.lane.b32.xlu0 %v536, 104
        %v1041 = vpop.permute.xlu0 %1040
        %1042 = vrot.lane.b32.xlu0 %v536, 72
        %v1043 = vpop.permute.xlu0 %1042
        %v1044 = vsel %vm548, %v1041, 0
        %v1046 = vsel %vm548, %v1043, 0
        %1048 = vmatprep.subr.mxu0 0.0
        %1049 = vmatpush1.xpose.msra.mxu0 0.0
        %1050 = vmatprep.subr.mxu0 0.0
        %1051 = vmatpush1.xpose.msra.mxu0 0.0
        %1052 = vmatprep.subr.mxu0 0.0
        %1053 = vmatpush1.xpose.msra.mxu0 0.0
        %1054 = vmatprep.subr.mxu0 0.0
        %1055 = vmatpush1.xpose.msra.mxu0 0.0
        %1056 = vmatprep.subr.mxu0 0.0
        %1057 = vmatpush1.xpose.msra.mxu0 0.0
        %1058 = vmatprep.subr.mxu0 0.0
        %1059 = vmatpush1.xpose.msra.mxu0 0.0
        %1060 = vmatprep.subr.mxu0 0.0
        %1061 = vmatpush1.xpose.msra.mxu0 0.0
        %1062 = vmatprep.subr.mxu0 0.0
        %1063 = vmatpush1.xpose.msra.mxu0 0.0
        %1064 = vmatprep.subr.mxu0 0.0
        %1065 = vmatpush1.xpose.msra.mxu0 0.0
        %1066 = vmatprep.subr.mxu0 0.0
        %1067 = vmatpush1.xpose.msra.mxu0 0.0
        %1068 = vmatprep.subr.mxu0 0.0
        %1069 = vmatpush1.xpose.msra.mxu0 0.0
        %1070 = vmatprep.subr.mxu0 0.0
        %1071 = vmatpush1.xpose.msra.mxu0 0.0
        %1072 = vmatprep.subr.mxu0 0.0
        %1073 = vmatpush1.xpose.msra.mxu0 0.0
        %1074 = vmatprep.subr.mxu0 0.0
        %1075 = vmatpush1.xpose.msra.mxu0 0.0
        %1076 = vmatprep.subr.mxu0 0.0
        %1077 = vmatpush1.xpose.msra.mxu0 0.0
        %1078 = vmatprep.subr.mxu0 0.0
        %1079 = vmatpush1.xpose.msra.mxu0 %v1046
        %1080 = vmatprep.subr.mxu0 0.0
        %1081 = vmatpush2.xpose.msra.mxu0 0.0
        %1082 = vmatprep.subr.mxu0 0.0
        %1083 = vmatpush2.xpose.msra.mxu0 0.0
        %1084 = vmatprep.subr.mxu0 0.0
        %1085 = vmatpush2.xpose.msra.mxu0 0.0
        %1086 = vmatprep.subr.mxu0 0.0
        %1087 = vmatpush2.xpose.msra.mxu0 0.0
        %1088 = vmatprep.subr.mxu0 0.0
        %1089 = vmatpush2.xpose.msra.mxu0 0.0
        %1090 = vmatprep.subr.mxu0 0.0
        %1091 = vmatpush2.xpose.msra.mxu0 0.0
        %1092 = vmatprep.subr.mxu0 0.0
        %1093 = vmatpush2.xpose.msra.mxu0 0.0
        %1094 = vmatprep.subr.mxu0 0.0
        %1095 = vmatpush2.xpose.msra.mxu0 0.0
        %1096 = vmatprep.subr.mxu0 0.0
        %1097 = vmatpush2.xpose.msra.mxu0 0.0
        %1098 = vmatprep.subr.mxu0 0.0
        %1099 = vmatpush2.xpose.msra.mxu0 0.0
        %1100 = vmatprep.subr.mxu0 0.0
        %1101 = vmatpush2.xpose.msra.mxu0 0.0
        %1102 = vmatprep.subr.mxu0 0.0
        %1103 = vmatpush2.xpose.msra.mxu0 0.0
        %1104 = vmatprep.subr.mxu0 0.0
        %1105 = vmatpush2.xpose.msra.mxu0 0.0
        %1106 = vmatprep.subr.mxu0 0.0
        %1107 = vmatpush2.xpose.msra.mxu0 0.0
        %1108 = vmatprep.subr.mxu0 0.0
        %1109 = vmatpush2.xpose.msra.mxu0 0.0
        %1110 = vmatprep.subr.mxu0 0.0
        %1111 = vmatpush2.xpose.msra.mxu0 0.0
        %1112 = vmatprep.mubr.f32.mxu0 0.0
        %1113 = vmatmul.mubr.f32.gmra.mxu0 %v1044
        %v1114 = vpop.f32.mrf.mxu0
        %v1115 = vadd.f32 %v543, %v1114
        %v1116 = vpop.f32.mrf.mxu0
        %1117 = vdwg.mxu0
        %v1118 = vsel %vm548, %v1115, -inf
        %1119 = vmax.xlane.f32.xlu0 %v1118
        %v1120 = vpop.xlane.xlu0 %1119
        %v1121 = vsub.f32 %v1115, %v1120
        %v1122 = vmul.f32 %v1121, 1.442695
        %v1123 = vpow.pop %v1122
        %v1124 = vsel %vm548, %v1123, 0.0
        %1125 = vadd.xlane.f32.xlu0 %v1124
        %v1126 = vpop.xlane.xlu0 %1125
        %1127 = vrot.lane.b32.xlu0 %v536, 40
        %v1128 = vpop.permute.xlu0 %1127
        %v1131 = vsel %vm548, %v1123, 0
        %1133 = vmatprep.subr.mxu0 0.0
        %1134 = vmatpush1.msra.mxu0 0.0
        %1135 = vmatprep.subr.mxu0 0.0
        %1136 = vmatpush1.msra.mxu0 0.0
        %1137 = vmatprep.subr.mxu0 0.0
        %1138 = vmatpush1.msra.mxu0 0.0
        %1139 = vmatprep.subr.mxu0 0.0
        %1140 = vmatpush1.msra.mxu0 0.0
        %1141 = vmatprep.subr.mxu0 0.0
        %1142 = vmatpush1.msra.mxu0 0.0
        %1143 = vmatprep.subr.mxu0 0.0
        %1144 = vmatpush1.msra.mxu0 0.0
        %1145 = vmatprep.subr.mxu0 0.0
        %1146 = vmatpush1.msra.mxu0 0.0
        %1147 = vmatprep.subr.mxu0 0.0
        %1148 = vmatpush1.msra.mxu0 0.0
        %1149 = vmatprep.subr.mxu0 0.0
        %1150 = vmatpush1.msra.mxu0 0.0
        %1151 = vmatprep.subr.mxu0 0.0
        %1152 = vmatpush1.msra.mxu0 0.0
        %1153 = vmatprep.subr.mxu0 0.0
        %1154 = vmatpush1.msra.mxu0 0.0
        %1155 = vmatprep.subr.mxu0 0.0
        %1156 = vmatpush1.msra.mxu0 0.0
        %1157 = vmatprep.subr.mxu0 0.0
        %1158 = vmatpush1.msra.mxu0 0.0
        %1159 = vmatprep.subr.mxu0 0.0
        %1160 = vmatpush1.msra.mxu0 0.0
        %1161 = vmatprep.subr.mxu0 0.0
        %1162 = vmatpush1.msra.mxu0 0.0
        %1163 = vmatprep.subr.mxu0 0.0
        %1164 = vmatpush1.msra.mxu0 %v1128
        %1165 = vmatprep.subr.mxu0 0.0
        %1166 = vmatpush2.msra.mxu0 0.0
        %1167 = vmatprep.subr.mxu0 0.0
        %1168 = vmatpush2.msra.mxu0 0.0
        %1169 = vmatprep.subr.mxu0 0.0
        %1170 = vmatpush2.msra.mxu0 0.0
        %1171 = vmatprep.subr.mxu0 0.0
        %1172 = vmatpush2.msra.mxu0 0.0
        %1173 = vmatprep.subr.mxu0 0.0
        %1174 = vmatpush2.msra.mxu0 0.0
        %1175 = vmatprep.subr.mxu0 0.0
        %1176 = vmatpush2.msra.mxu0 0.0
        %1177 = vmatprep.subr.mxu0 0.0
        %1178 = vmatpush2.msra.mxu0 0.0
        %1179 = vmatprep.subr.mxu0 0.0
        %1180 = vmatpush2.msra.mxu0 0.0
        %1181 = vmatprep.subr.mxu0 0.0
        %1182 = vmatpush2.msra.mxu0 0.0
        %1183 = vmatprep.subr.mxu0 0.0
        %1184 = vmatpush2.msra.mxu0 0.0
        %1185 = vmatprep.subr.mxu0 0.0
        %1186 = vmatpush2.msra.mxu0 0.0
        %1187 = vmatprep.subr.mxu0 0.0
        %1188 = vmatpush2.msra.mxu0 0.0
        %1189 = vmatprep.subr.mxu0 0.0
        %1190 = vmatpush2.msra.mxu0 0.0
        %1191 = vmatprep.subr.mxu0 0.0
        %1192 = vmatpush2.msra.mxu0 0.0
        %1193 = vmatprep.subr.mxu0 0.0
        %1194 = vmatpush2.msra.mxu0 0.0
        %1195 = vmatprep.subr.mxu0 0.0
        %1196 = vmatpush2.msra.mxu0 0.0
        %1197 = vmatprep.mubr.f32.mxu0 0.0
        %1198 = vmatmul.mubr.f32.gmra.mxu0 %v1131
        %v1199 = vpop.f32.mrf.mxu0
        %v1200 = vadd.f32 0.0, %v1199
        %v1201 = vpop.f32.mrf.mxu0
        %1202 = vdwg.mxu0
        %v1203 = vrcp.pop %v1126
        %v1204 = vmul.f32 %v1200, %v1203
        %1206 = vrot.lane.b32.xlu0 %v874, 8
        %v1207 = vpop.permute.xlu0 %1206
        %1210 = vrot.lane.b32.xlu0 %v1039, 16
        %v1211 = vpop.permute.xlu0 %1210
        %1214 = vrot.lane.b32.xlu0 %v1204, 24
        %v1215 = vpop.permute.xlu0 %1214
        %v1217 = vsel %vm548, %v709, %v1207
        %vm1218 = vcmask 130048
        %v1219 = vsel %vm1218, %v1217, %v1211
        %vm1220 = vcmask 195584
        %v1221 = vsel %vm1220, %v1219, %v1215
        %v1222 = vld [vmem:[#allocation8] sm:$0xff]
        %v1223 = vld [vmem:[#allocation8 + $0x8] sm:$0xff]
        %v1224 = vld [vmem:[#allocation8 + $0x10] sm:$0xff]
        %v1225 = vld [vmem:[#allocation8 + $0x18] sm:$0xff]
        %v1226 = vld [vmem:[%s5] sm:$0x1]
        %v1228 = vlaneseq
        %v1229 = vshrl.u32 %v1228, 7
        %v1230 = vsub.s32 0, %v1229
        %v1231 = vrot.slane %v1226, %v1230
        %v1234 = vsel %vm465, %v1221, 0
        %1236 = vmatprep.subr.mxu0 0.0
        %1237 = vmatpush1.msra.mxu0 0.0
        %1238 = vmatprep.subr.mxu0 0.0
        %1239 = vmatpush1.msra.mxu0 0.0
        %1240 = vmatprep.subr.mxu0 0.0
        %1241 = vmatpush1.msra.mxu0 0.0
        %1242 = vmatprep.subr.mxu0 0.0
        %1243 = vmatpush1.msra.mxu0 0.0
        %1244 = vmatprep.subr.mxu0 0.0
        %1245 = vmatpush1.msra.mxu0 0.0
        %1246 = vmatprep.subr.mxu0 0.0
        %1247 = vmatpush1.msra.mxu0 0.0
        %1248 = vmatprep.subr.mxu0 0.0
        %1249 = vmatpush1.msra.mxu0 0.0
        %1250 = vmatprep.subr.mxu0 0.0
        %1251 = vmatpush1.msra.mxu0 0.0
        %1252 = vmatprep.subr.mxu0 0.0
        %1253 = vmatpush1.msra.mxu0 0.0
        %1254 = vmatprep.subr.mxu0 0.0
        %1255 = vmatpush1.msra.mxu0 0.0
        %1256 = vmatprep.subr.mxu0 0.0
        %1257 = vmatpush1.msra.mxu0 0.0
        %1258 = vmatprep.subr.mxu0 0.0
        %1259 = vmatpush1.msra.mxu0 0.0
        %1260 = vmatprep.subr.mxu0 0.0
        %1261 = vmatpush1.msra.mxu0 %v1225
        %1262 = vmatprep.subr.mxu0 0.0
        %1263 = vmatpush1.msra.mxu0 %v1224
        %1264 = vmatprep.subr.mxu0 0.0
        %1265 = vmatpush1.msra.mxu0 %v1223
        %1266 = vmatprep.subr.mxu0 0.0
        %1267 = vmatpush1.msra.mxu0 %v1222
        %1268 = vmatprep.subr.mxu0 0.0
        %1269 = vmatpush2.msra.mxu0 0.0
        %1270 = vmatprep.subr.mxu0 0.0
        %1271 = vmatpush2.msra.mxu0 0.0
        %1272 = vmatprep.subr.mxu0 0.0
        %1273 = vmatpush2.msra.mxu0 0.0
        %1274 = vmatprep.subr.mxu0 0.0
        %1275 = vmatpush2.msra.mxu0 0.0
        %1276 = vmatprep.subr.mxu0 0.0
        %1277 = vmatpush2.msra.mxu0 0.0
        %1278 = vmatprep.subr.mxu0 0.0
        %1279 = vmatpush2.msra.mxu0 0.0
        %1280 = vmatprep.subr.mxu0 0.0
        %1281 = vmatpush2.msra.mxu0 0.0
        %1282 = vmatprep.subr.mxu0 0.0
        %1283 = vmatpush2.msra.mxu0 0.0
        %1284 = vmatprep.subr.mxu0 0.0
        %1285 = vmatpush2.msra.mxu0 0.0
        %1286 = vmatprep.subr.mxu0 0.0
        %1287 = vmatpush2.msra.mxu0 0.0
        %1288 = vmatprep.subr.mxu0 0.0
        %1289 = vmatpush2.msra.mxu0 0.0
        %1290 = vmatprep.subr.mxu0 0.0
        %1291 = vmatpush2.msra.mxu0 0.0
        %1292 = vmatprep.subr.mxu0 0.0
        %1293 = vmatpush2.msra.mxu0 0.0
        %1294 = vmatprep.subr.mxu0 0.0
        %1295 = vmatpush2.msra.mxu0 0.0
        %1296 = vmatprep.subr.mxu0 0.0
        %1297 = vmatpush2.msra.mxu0 0.0
        %1298 = vmatprep.subr.mxu0 0.0
        %1299 = vmatpush2.msra.mxu0 0.0
        %1300 = vmatprep.mubr.f32.mxu0 0.0
        %1301 = vmatmul.mubr.f32.gmra.mxu0 %v1234
        %v1302 = vpop.f32.mrf.mxu0
        %v1303 = vadd.f32 %v1231, %v1302
        %v1304 = vpop.f32.mrf.mxu0
        %1305 = vdwg.mxu0
        %v1306 = vld [vmem:[#allocation10] sm:$0xff]
        %v1307 = vld [vmem:[#allocation10 + $0x8] sm:$0xff]
        %v1308 = vld [vmem:[#allocation10 + $0x10] sm:$0xff]
        %v1309 = vld [vmem:[#allocation10 + $0x18] sm:$0xff]
        %v1310 = vld [vmem:[%s7] sm:$0x1]
        %v1312 = vlaneseq
        %v1313 = vshrl.u32 %v1312, 7
        %v1314 = vsub.s32 0, %v1313
        %v1315 = vrot.slane %v1310, %v1314
        %v1318 = vsel %vm465, %v1303, 0
        %1320 = vmatprep.subr.mxu0 0.0
        %1321 = vmatpush1.msra.mxu0 0.0
        %1322 = vmatprep.subr.mxu0 0.0
        %1323 = vmatpush1.msra.mxu0 0.0
        %1324 = vmatprep.subr.mxu0 0.0
        %1325 = vmatpush1.msra.mxu0 0.0
        %1326 = vmatprep.subr.mxu0 0.0
        %1327 = vmatpush1.msra.mxu0 0.0
        %1328 = vmatprep.subr.mxu0 0.0
        %1329 = vmatpush1.msra.mxu0 0.0
        %1330 = vmatprep.subr.mxu0 0.0
        %1331 = vmatpush1.msra.mxu0 0.0
        %1332 = vmatprep.subr.mxu0 0.0
        %1333 = vmatpush1.msra.mxu0 0.0
        %1334 = vmatprep.subr.mxu0 0.0
        %1335 = vmatpush1.msra.mxu0 0.0
        %1336 = vmatprep.subr.mxu0 0.0
        %1337 = vmatpush1.msra.mxu0 0.0
        %1338 = vmatprep.subr.mxu0 0.0
        %1339 = vmatpush1.msra.mxu0 0.0
        %1340 = vmatprep.subr.mxu0 0.0
        %1341 = vmatpush1.msra.mxu0 0.0
        %1342 = vmatprep.subr.mxu0 0.0
        %1343 = vmatpush1.msra.mxu0 0.0
        %1344 = vmatprep.subr.mxu0 0.0
        %1345 = vmatpush1.msra.mxu0 %v1309
        %1346 = vmatprep.subr.mxu0 0.0
        %1347 = vmatpush1.msra.mxu0 %v1308
        %1348 = vmatprep.subr.mxu0 0.0
        %1349 = vmatpush1.msra.mxu0 %v1307
        %1350 = vmatprep.subr.mxu0 0.0
        %1351 = vmatpush1.msra.mxu0 %v1306
        %1352 = vmatprep.subr.mxu0 0.0
        %1353 = vmatpush2.msra.mxu0 0.0
        %1354 = vmatprep.subr.mxu0 0.0
        %1355 = vmatpush2.msra.mxu0 0.0
        %1356 = vmatprep.subr.mxu0 0.0
        %1357 = vmatpush2.msra.mxu0 0.0
        %1358 = vmatprep.subr.mxu0 0.0
        %1359 = vmatpush2.msra.mxu0 0.0
        %1360 = vmatprep.subr.mxu0 0.0
        %1361 = vmatpush2.msra.mxu0 0.0
        %1362 = vmatprep.subr.mxu0 0.0
        %1363 = vmatpush2.msra.mxu0 0.0
        %1364 = vmatprep.subr.mxu0 0.0
        %1365 = vmatpush2.msra.mxu0 0.0
        %1366 = vmatprep.subr.mxu0 0.0
        %1367 = vmatpush2.msra.mxu0 0.0
        %1368 = vmatprep.subr.mxu0 0.0
        %1369 = vmatpush2.msra.mxu0 0.0
        %1370 = vmatprep.subr.mxu0 0.0
        %1371 = vmatpush2.msra.mxu0 0.0
        %1372 = vmatprep.subr.mxu0 0.0
        %1373 = vmatpush2.msra.mxu0 0.0
        %1374 = vmatprep.subr.mxu0 0.0
        %1375 = vmatpush2.msra.mxu0 0.0
        %1376 = vmatprep.subr.mxu0 0.0
        %1377 = vmatpush2.msra.mxu0 0.0
        %1378 = vmatprep.subr.mxu0 0.0
        %1379 = vmatpush2.msra.mxu0 0.0
        %1380 = vmatprep.subr.mxu0 0.0
        %1381 = vmatpush2.msra.mxu0 0.0
        %1382 = vmatprep.subr.mxu0 0.0
        %1383 = vmatpush2.msra.mxu0 0.0
        %1384 = vmatprep.mubr.f32.mxu0 0.0
        %1385 = vmatmul.mubr.f32.gmra.mxu0 %v1318
        %v1386 = vpop.f32.mrf.mxu0
        %v1387 = vadd.f32 %v1315, %v1386
        %v1388 = vpop.f32.mrf.mxu0
        %1389 = vdwg.mxu0
        %v1390 = vadd.f32 %v1387, %v452
        %v1391 = vld [vmem:[%s8] sm:$0x1]
        %v1392 = vld [vmem:[%s9] sm:$0x1]
        %v1393 = vsel %vm465, %v1390, 0.0
        %1394 = vadd.xlane.f32.xlu0 %v1393
        %v1395 = vpop.xlane.xlu0 %1394
        %v1396 = vrcp.pop 32.0
        %v1397 = vmul.f32 %v1395, %v1396
        %v1398 = vsub.f32 %v1390, %v1397
        %v1399 = vmul.f32 %v1398, %v1398
        %v1400 = vsel %vm465, %v1399, 0.0
        %1401 = vadd.xlane.f32.xlu0 %v1400
        %v1402 = vpop.xlane.xlu0 %1401
        %v1403 = vmul.f32 %v1402, %v1396
        %v1404 = vadd.f32 %v1403, 1e-05
        %v1405 = vrsqrt.pop %v1404
        %v1406 = vmul.f32 %v1398, %v1405
        %v1408 = vlaneseq
        %v1409 = vshrl.u32 %v1408, 7
        %v1410 = vsub.s32 0, %v1409
        %v1411 = vrot.slane %v1391, %v1410
        %v1413 = vmul.f32 %v1406, %v1411
        %v1415 = vlaneseq
        %v1416 = vshrl.u32 %v1415, 7
        %v1417 = vsub.s32 0, %v1416
        %v1418 = vrot.slane %v1392, %v1417
        %v1420 = vadd.f32 %v1413, %v1418
        %1421 = vst.msk [vmem:[%s451] sm:$0xff] %vm465, %v1420
        %s1422 = sand.u32 %s259, 1
        %s1423 = scalar_lea.sflag [#allocation4], %s1422
        %s1424 = sand.u32 %s259, 1
        %s1425 = smul.addr %s1424, 8
        %s1426 = scalar_lea.vmem [#allocation11], %s1425
        // Predicated region
        $region81: #{tpu_custom_call.1} parent=59 // pred_check
          %p1427 = pneg %p269
        $region82: #{tpu_custom_call.1} parent=59 // pred_check_branch
          %1429 = sbr.rel (%p1427) target = $region84
        $region83: #{tpu_custom_call.1} parent=59 // pred_region
          %s1431 = ssub.s32 128, 128
          %1432 = vsyncadd %s1423, %s1431
          %s1433 = smul.addr %s31, 128
          %s1434 = scalar_lea.hbm %s10, %s1433
          %s1436 = sshll.u32 %s1426, 4
          %s1437 = int_to_ptr.vmem [resolvable:$true] %s1436
          %1439 = dma.vmem_to_hbm [thread:$0]  %s1437, 128, %s1434, %s1423
        $region84: #{tpu_custom_call.1} parent=59 // pred_fallthru
          _
      $region60: #{tpu_custom_call.1} parent=5 // pred_fallthru
        _
      %p1440 = scmp.le.s32.totalorder 2, %s26
      // Predicated region
      $region85: #{tpu_custom_call.1} parent=5 // pred_check
        %p1441 = pneg %p1440
      $region86: #{tpu_custom_call.1} parent=5 // pred_check_branch
        %1443 = sbr.rel (%p1441) target = $region88
      $region87: #{tpu_custom_call.1} parent=5 // pred_region
        %s1444 = ssub.s32 %s26, 2
        // Predicated region
        $region89: #{tpu_custom_call.1} parent=87 // pred_check
          %p1445 = pneg %p275
        $region90: #{tpu_custom_call.1} parent=87 // pred_check_branch
          %1447 = sbr.rel (%p1445) target = $region92
        $region91: #{tpu_custom_call.1} parent=87 // pred_region
          %s1448 = sand.u32 %s260, 1
          %s1449 = scalar_lea.sflag [#allocation4], %s1448
          %s1450 = sand.u32 %s260, 1
          %s1451 = smul.addr %s1450, 8
          %s1452 = scalar_lea.vmem [#allocation11], %s1451
          %1453 = dma.done %s1449, 128
        $region92: #{tpu_custom_call.1} parent=87 // pred_fallthru
          _
      $region88: #{tpu_custom_call.1} parent=5 // pred_fallthru
        _
    $region6: #{tpu_custom_call.1} parent=1 // loop_footer
      %s30 = sadd.s32 1, %s26
    $region7: #{tpu_custom_call.1} parent=1 // loop_footer_branch
      %25 = sbr.rel target = $region3
    $region8: #{tpu_custom_call.1} parent=1 // loop_exit
      _
    %1454 = vsyncpa [#allocation3], 1
    %s1455 = scalar_lea.sflag [#allocation3], 1
    %1456 = vsyncpa %s1455, 1
    %1457 = vsyncpa [#allocation6], 1
    %s1458 = scalar_lea.sflag [#allocation6], 1
    %1459 = vsyncpa %s1458, 1
    %1460 = vsyncpa [#allocation9], 1
    %1461 = vsyncpa [#allocation4], 1
    %s1462 = scalar_lea.sflag [#allocation4], 1
    %1463 = vsyncpa %s1462, 1

</llo_original>
